<compile_context>
chip_gen: v5e
topology: v5e:2x2
jax: 0.10.0
libtpu: 0.0.40
codegen_flags: <defaults>
</compile_context>

<pallas_src>
import numpy as np
import jax
import jax.numpy as jnp
from jax import lax
from jax.experimental import pallas as pl
from jax.experimental.pallas import tpu as pltpu

# ----- config (small, deterministic, consistent with the module's __init__) -----
WORDS_NUM = 128     # vocab size (token id 0 == padding)
WORDS_DIM = 32      # embedding dim == LSTM input size
HIDDEN    = 32      # dim (per-direction LSTM hidden size)
REL_LABEL = 16      # numrels = max(relD.values()) + 1
SEQ       = 8       # sequence length
BATCH     = 8       # batch size (multiple of 8 -> fills f32 sublanes, perf review)
BN_EPS    = 1e-5


# =============================== Pallas kernel ===============================

def relation_classifier_kernel(tok_ref, slab_ref, out_ref):
    B = out_ref.shape[0]
    S = tok_ref.shape[0] // B
    V, H = WORDS_NUM, HIDDEN
    H2, G4, G8, R = 2 * H, 4 * H, 8 * H, REL_LABEL

    # ---- embedding + input projection (both directions) + biases: ONE MXU op ----
    # TODO(synk): out-of-vocab ids give a zero row here (dropping the folded bias
    #             too) instead of raising like nn.Embedding; inputs are validated
    #             host-side in __main__.
    tok = tok_ref[...]                                                   # (S*B, 1), row = t*B + b
    onehot = (lax.broadcasted_iota(jnp.int32, (S * B, V), 1) == tok).astype(jnp.float32)
    xp = jnp.dot(onehot, slab_ref[0:V, :],
                 preferred_element_type=jnp.float32)                    # (S*B, 8H)
    valid = tok != 0                                                     # (S*B, 1) bool pad mask

    # static lane masks selecting the backward-direction sub-blocks (H is a power of 2:
    # 32-lane fwd/bwd blocks alternate, so bit H of the lane index flags "backward").
    is_bwd_g = (lax.broadcasted_iota(jnp.int32, (1, G8), 1) & H) != 0    # (1, 8H)
    is_bwd_h = (lax.broadcasted_iota(jnp.int32, (1, H2), 1) & H) != 0    # (1, 2H)

    whh = slab_ref[V:V + H2, :]                                          # (2H, 8H) block-diag

    # ---- h/c-independent per-step quantities hoisted out of the serial chain ----
    xg_steps, keep_steps = [], []
    for t in range(S):
        tb = S - 1 - t                           # backward direction consumes time S-1-t
        xg_steps.append(jnp.where(is_bwd_g,
                                  xp[tb * B:(tb + 1) * B, :],
                                  xp[t * B:(t + 1) * B, :]))             # (B, 8H)
        v_f = valid[t * B:(t + 1) * B, :]                                # (B, 1) bool
        v_b = valid[tb * B:(tb + 1) * B, :]
        keep_steps.append((is_bwd_h & v_b) | (~is_bwd_h & v_f))          # (B, 2H) bool

    # ---- fused bidirectional recurrence: one 8H-wide gate pass per step ----
    # state layout: h = [h_fwd | h_bwd], c = [c_fwd | c_bwd]   (B, 2H)
    # TODO(synk): pltpu.matmul_push_rhs/matmul_acc_lhs/matmul_pop could keep `whh`
    #             staged in the MXU across the 8 serial steps (perf review #1);
    #             kept as jnp.dot because the 256-wide RHS spans two MXUs on v5e
    #             and the raw-MXU path is not portable across generations.
    h = jnp.zeros((B, H2), jnp.float32)
    c = jnp.zeros((B, H2), jnp.float32)
    for t in range(S):                           # statically unrolled, 8 serial steps
        gates = xg_steps[t] + jnp.dot(h, whh, preferred_element_type=jnp.float32)  # (B, 8H)
        sg = jax.nn.sigmoid(gates)               # ONE EUP pass covers i, f, g, o blocks
        # tanh(a) == 2*sigmoid(2a) - 1; the g columns were pre-scaled x2 host-side,
        # so no separate tanh(g) EUP push is needed.
        gg = 2.0 * sg[:, 2 * H2:3 * H2] - 1.0
        c_new = sg[:, H2:2 * H2] * c + sg[:, 0:H2] * gg
        h_new = sg[:, 3 * H2:4 * H2] * jnp.tanh(c_new)

        keep = keep_steps[t]                     # padded steps (token id 0) keep the state
        c = jnp.where(keep, c_new, c)
        h = jnp.where(keep, h_new, h)

    # ht.view(B, -1) == [h_fwd | h_bwd] == h already, no concat needed.

    # ---- head: Linear (+ folded eval BatchNorm) -> ReLU -> Dropout(id) -> Linear ----
    w1 = slab_ref[V + H2:V + 2 * H2, 0:H2]                 # (2H, 2H), BN folded in
    w2 = slab_ref[V + H2:V + 2 * H2, G4:G4 + R]            # (2H, R)
    b1 = slab_ref[V + 2 * H2:V + 2 * H2 + 1, 0:H2]         # (1, 2H)
    b2 = slab_ref[V + 2 * H2:V + 2 * H2 + 1, G4:G4 + R]    # (1, R)

    z = jnp.maximum(jnp.dot(h, w1, preferred_element_type=jnp.float32) + b1, 0.0)
    out_ref[...] = jnp.dot(z, w2, preferred_element_type=jnp.float32) + b2


def relation_classifier(tokens, slab):
    """tokens: (B, S) int token ids; slab: packed parameters from pack_params()."""
    B_, S_ = tokens.shape
    # Host-side time-major flatten: in-kernel row = t*B + b, no tile-crossing
    # reshape inside the kernel prologue (perf review #4).
    tok_rows = tokens.T.reshape(S_ * B_, 1).astype(jnp.int32)
    vmem = pl.BlockSpec(memory_space=pltpu.MemorySpace.VMEM)
    # Gridless: the whole problem (~270 KB of params + a few KB of activations)
    # fits VMEM on v5e/v6e/v7x.  For large batches, add a grid over batch chunks
    # (slab index_map -> (0, 0)) with dimension_semantics=("parallel",) for v7x.
    return pl.pallas_call(
        relation_classifier_kernel,
        out_shape=jax.ShapeDtypeStruct((B_, REL_LABEL), jnp.float32),
        in_specs=[vmem, vmem],             # 2 input DMAs total (tokens + one param slab)
        out_specs=vmem,
    )(tok_rows, slab)


# ====================== host-side parameter prep / folding ======================

def pack_params(p):
    """Fold + pack all parameters into one (264, 256) f32 slab (a single DMA).

    Row layout:
      [0   :128)  xin_table = embed @ [wih interleaved] + biases      (V, 8H)
      [128 :192)  block-diagonal W_hh for the fused state [h_f|h_b]   (2H, 8H)
      [192 :256)  cols [0:64) = BN-folded w1, cols [128:144) = w2
      row 256:    cols [0:64) = BN-folded b1, cols [128:144) = b2
    Gate column layout (8H): [i_f i_b | f_f f_b | g_f g_b | o_f o_b], H lanes each.
    The g-gate columns of xin_table and W_hh are pre-scaled x2 so the kernel can
    compute tanh(g) as 2*sigmoid(2g) - 1 inside the single sigmoid pass.
    """
    H, H2, G4, G8 = HIDDEN, 2 * HIDDEN, 4 * HIDDEN, 8 * HIDDEN
    V, R = WORDS_NUM, REL_LABEL
    hp = lax.Precision.HIGHEST

    def gate_interleave(mf, mb):
        # (in, 4H) fwd / bwd with PyTorch gate order i,f,g,o -> (in, 8H) [fwd|bwd] per gate
        blocks = []
        for gi in range(4):
            blocks.append(mf[:, gi * H:(gi + 1) * H])
            blocks.append(mb[:, gi * H:(gi + 1) * H])
        return jnp.concatenate(blocks, axis=1)

    # embedding + input projection + (b_ih + b_hh) folded into one lookup table
    w_in = gate_interleave(p["wih_f"], p["wih_b"])                # (D, 8H)
    b_in = gate_interleave(p["b_f"], p["b_b"])                    # (1, 8H)
    xin_table = jnp.dot(p["embed"], w_in, precision=hp) + b_in    # (V, 8H)

    # block-diagonal recurrent weights: [h_f | h_b] (2H) -> gates (8H)
    whh = jnp.zeros((H2, G8), jnp.float32)
    for gi in range(4):
        whh = whh.at[0:H, gi * H2:gi * H2 + H].set(p["whh_f"][:, gi * H:(gi + 1) * H])
        whh = whh.at[H:H2, gi * H2 + H:(gi + 1) * H2].set(p["whh_b"][:, gi * H:(gi + 1) * H])

    # pre-scale g-gate pre-activations x2 (tanh fold, perf review #2)
    g_lo, g_hi = 2 * H2, 3 * H2
    xin_table = xin_table.at[:, g_lo:g_hi].multiply(2.0)
    whh = whh.at[:, g_lo:g_hi].multiply(2.0)

    # fold eval-mode BatchNorm1d into the first Linear
    scale = p["gamma"] * lax.rsqrt(p["var"] + BN_EPS)             # (1, 2H)
    w1f = p["w1"] * scale
    b1f = (p["b1"] - p["mean"]) * scale + p["beta"]

    slab = jnp.zeros((V + 2 * H2 + 8, G8), jnp.float32)
    slab = slab.at[0:V, :].set(xin_table)
    slab = slab.at[V:V + H2, :].set(whh)
    slab = slab.at[V + H2:V + 2 * H2, 0:H2].set(w1f)
    slab = slab.at[V + H2:V + 2 * H2, G4:G4 + R].set(p["w2"])
    slab = slab.at[V + 2 * H2, 0:H2].set(b1f[0])
    slab = slab.at[V + 2 * H2, G4:G4 + R].set(p["b2"][0])
    return slab


def init_params(key):
    ks = jax.random.split(key, 16)
    H4 = 4 * HIDDEN

    def unif(k, shape, bound):
        return jax.random.uniform(k, shape, jnp.float32, -bound, bound)

    b_lstm = 1.0 / np.sqrt(HIDDEN)
    b_fc = 1.0 / np.sqrt(2 * HIDDEN)
    return dict(
        embed=jax.random.normal(ks[0], (WORDS_NUM, WORDS_DIM), jnp.float32),
        # LSTM weights pre-transposed to (in, out); bias = b_ih + b_hh folded; gate order i,f,g,o
        wih_f=unif(ks[1], (WORDS_DIM, H4), b_lstm),
        whh_f=unif(ks[2], (HIDDEN, H4), b_lstm),
        b_f=unif(ks[3], (1, H4), b_lstm),
        wih_b=unif(ks[4], (WORDS_DIM, H4), b_lstm),
        whh_b=unif(ks[5], (HIDDEN, H4), b_lstm),
        b_b=unif(ks[6], (1, H4), b_lstm),
        # lin / bn (non-trivial BN stats so the folding is actually exercised) / linout
        w1=unif(ks[7], (2 * HIDDEN, 2 * HIDDEN), b_fc),
        b1=unif(ks[8], (1, 2 * HIDDEN), b_fc),
        gamma=jax.random.uniform(ks[9], (1, 2 * HIDDEN), jnp.float32, 0.5, 1.5),
        beta=0.1 * jax.random.normal(ks[10], (1, 2 * HIDDEN), jnp.float32),
        mean=0.1 * jax.random.normal(ks[11], (1, 2 * HIDDEN), jnp.float32),
        var=jax.random.uniform(ks[12], (1, 2 * HIDDEN), jnp.float32, 0.5, 1.5),
        w2=unif(ks[13], (2 * HIDDEN, REL_LABEL), b_fc),
        b2=unif(ks[14], (1, REL_LABEL), b_fc),
    )


# ============================= pure-JAX reference =============================

def reference(tokens, p):
    """Unfused / unpacked reference with identical semantics, for validation.

    Uses HIGHEST matmul precision so the kernel (full-f32 MXU path) and the
    reference agree to near machine precision (tight tolerance per review).
    """
    hp = lax.Precision.HIGHEST
    tok = tokens.T                      # (S, B)
    x = p["embed"][tok]                 # (S, B, D)
    mask = tok != 0                     # (S, B) padding mask

    def cell(xt, h, c, wih, whh, b, m):
        gates = jnp.dot(xt, wih, precision=hp) + jnp.dot(h, whh, precision=hp) + b
        i = jax.nn.sigmoid(gates[:, :HIDDEN])
        f = jax.nn.sigmoid(gates[:, HIDDEN:2 * HIDDEN])
        g = jnp.tanh(gates[:, 2 * HIDDEN:3 * HIDDEN])
        o = jax.nn.sigmoid(gates[:, 3 * HIDDEN:])
        c_new = f * c + i * g
        h_new = o * jnp.tanh(c_new)
        m = m[:, None]
        return jnp.where(m, h_new, h), jnp.where(m, c_new, c)

    B_ = tokens.shape[0]
    h_f = c_f = jnp.zeros((B_, HIDDEN), jnp.float32)
    for t in range(SEQ):
        h_f, c_f = cell(x[t], h_f, c_f, p["wih_f"], p["whh_f"], p["b_f"], mask[t])
    h_b = c_b = jnp.zeros((B_, HIDDEN), jnp.float32)
    for t in range(SEQ - 1, -1, -1):
        h_b, c_b = cell(x[t], h_b, c_b, p["wih_b"], p["whh_b"], p["b_b"], mask[t])

    feat = jnp.concatenate([h_f, h_b], axis=1)                       # (B, 2H)
    z = jnp.dot(feat, p["w1"], precision=hp) + p["b1"]
    z = (z - p["mean"]) * lax.rsqrt(p["var"] + BN_EPS) * p["gamma"] + p["beta"]
    z = jnp.maximum(z, 0.0)
    return jnp.dot(z, p["w2"], precision=hp) + p["b2"]               # logits


if __name__ == "__main__":
    key = jax.random.PRNGKey(0)
    kp, kt = jax.random.split(key)
    params = init_params(kp)
    slab = pack_params(params)

    # x: (batch, seq) int token ids; id 0 is padding -> pad tails of a couple of rows
    tokens = jax.random.randint(kt, (BATCH, SEQ), 1, WORDS_NUM, dtype=jnp.int32)
    tokens = tokens.at[0, SEQ - 2:].set(0)
    tokens = tokens.at[3, SEQ - 3:].set(0)
    # nn.Embedding would raise on out-of-range ids; validate host-side here since the
    # one-hot lookup in-kernel fails silently for OOV tokens.
    assert 0 <= int(tokens.min()) and int(tokens.max()) < WORDS_NUM

    out = jax.block_until_ready(relation_classifier(tokens, slab))
    ref = reference(tokens, params)

    # Tightened from 1e-2 (review): remaining slack covers EUP-vs-XLA transcendental
    # ulp differences and f32 MXU-pass rounding accumulated over 8 recurrent steps.
    np.testing.assert_allclose(np.asarray(out), np.asarray(ref), rtol=1e-4, atol=1e-5)
    assert out.shape == (BATCH, REL_LABEL)
    print("KERNEL_OK")
</pallas_src>

<mosaic_0001>
module attributes {stable_mosaic.version = 11 : i64} {
  func.func @relation_classifier_kernel(%arg0: memref<64x1xi32, #tpu.memory_space<vmem>>, %arg1: memref<264x256xf32, #tpu.memory_space<vmem>>, %arg2: memref<8x16xf32, #tpu.memory_space<vmem>>) attributes {dimension_semantics = [], scalar_prefetch = 0 : i64, scratch_operands = 0 : i64, tpu.core_type = #tpu.core_type<tc>} {
    %c0 = arith.constant 0 : index
    %c0_0 = arith.constant 0 : index
    %0 = vector.load %arg0[%c0, %c0_0] : memref<64x1xi32, #tpu.memory_space<vmem>>, vector<64x1xi32>
    %1 = tpu.iota {dimensions = array<i32: 1>} : vector<64x128xi32>
    %2 = vector.broadcast %0 : vector<64x1xi32> to vector<64x128xi32>
    %3 = arith.cmpi eq, %1, %2 : vector<64x128xi32>
    %4 = arith.extui %3 : vector<64x128xi1> to vector<64x128xi32>
    %5 = arith.sitofp %4 : vector<64x128xi32> to vector<64x128xf32>
    %c0_1 = arith.constant 0 : index
    %c0_2 = arith.constant 0 : index
    %6 = vector.load %arg1[%c0_1, %c0_2] : memref<264x256xf32, #tpu.memory_space<vmem>>, vector<128x256xf32>
    %cst = arith.constant dense<0.000000e+00> : vector<64x256xf32>
    %7 = tpu.matmul %5, %6, %cst {dimension_numbers = #tpu.dot_dimension_numbers<[1], [0], [0], [1], [0, 0, 1, 1], [], []>} : vector<64x128xf32>, vector<128x256xf32>, vector<64x256xf32> -> vector<64x256xf32>
    %c0_i32 = arith.constant 0 : i32
    %8 = vector.broadcast %c0_i32 : i32 to vector<64x1xi32>
    %9 = arith.cmpi ne, %0, %8 : vector<64x1xi32>
    %10 = tpu.iota {dimensions = array<i32: 1>} : vector<1x256xi32>
    %c32_i32 = arith.constant 32 : i32
    %11 = vector.broadcast %c32_i32 : i32 to vector<1x256xi32>
    %12 = arith.andi %10, %11 : vector<1x256xi32>
    %c0_i32_3 = arith.constant 0 : i32
    %13 = vector.broadcast %c0_i32_3 : i32 to vector<1x256xi32>
    %14 = arith.cmpi ne, %12, %13 : vector<1x256xi32>
    %15 = tpu.iota {dimensions = array<i32: 1>} : vector<1x64xi32>
    %c32_i32_4 = arith.constant 32 : i32
    %16 = vector.broadcast %c32_i32_4 : i32 to vector<1x64xi32>
    %17 = arith.andi %15, %16 : vector<1x64xi32>
    %c0_i32_5 = arith.constant 0 : i32
    %18 = vector.broadcast %c0_i32_5 : i32 to vector<1x64xi32>
    %19 = arith.cmpi ne, %17, %18 : vector<1x64xi32>
    %c128 = arith.constant 128 : index
    %c0_6 = arith.constant 0 : index
    %20 = vector.load %arg1[%c128, %c0_6] : memref<264x256xf32, #tpu.memory_space<vmem>>, vector<64x256xf32>
    %21 = vector.extract_strided_slice %7 {offsets = [56, 0], sizes = [8, 256], strides = [1, 1]} : vector<64x256xf32> to vector<8x256xf32>
    %22 = vector.extract_strided_slice %7 {offsets = [0, 0], sizes = [8, 256], strides = [1, 1]} : vector<64x256xf32> to vector<8x256xf32>
    %23 = vector.shape_cast %14 : vector<1x256xi1> to vector<1x256xi1>
    %24 = vector.broadcast %23 : vector<1x256xi1> to vector<8x256xi1>
    %25 = arith.select %24, %21, %22 : vector<8x256xi1>, vector<8x256xf32>
    %26 = vector.extract_strided_slice %9 {offsets = [0, 0], sizes = [8, 1], strides = [1, 1]} : vector<64x1xi1> to vector<8x1xi1>
    %27 = vector.extract_strided_slice %9 {offsets = [56, 0], sizes = [8, 1], strides = [1, 1]} : vector<64x1xi1> to vector<8x1xi1>
    %28 = vector.broadcast %19 : vector<1x64xi1> to vector<8x64xi1>
    %29 = vector.broadcast %27 : vector<8x1xi1> to vector<8x64xi1>
    %30 = arith.andi %28, %29 : vector<8x64xi1>
    %cst_7 = arith.constant dense<true> : vector<1x64xi1>
    %31 = arith.xori %19, %cst_7 : vector<1x64xi1>
    %32 = vector.broadcast %31 : vector<1x64xi1> to vector<8x64xi1>
    %33 = vector.broadcast %26 : vector<8x1xi1> to vector<8x64xi1>
    %34 = arith.andi %32, %33 : vector<8x64xi1>
    %35 = arith.ori %30, %34 : vector<8x64xi1>
    %36 = vector.extract_strided_slice %7 {offsets = [48, 0], sizes = [8, 256], strides = [1, 1]} : vector<64x256xf32> to vector<8x256xf32>
    %37 = vector.extract_strided_slice %7 {offsets = [8, 0], sizes = [8, 256], strides = [1, 1]} : vector<64x256xf32> to vector<8x256xf32>
    %38 = vector.shape_cast %14 : vector<1x256xi1> to vector<1x256xi1>
    %39 = vector.broadcast %38 : vector<1x256xi1> to vector<8x256xi1>
    %40 = arith.select %39, %36, %37 : vector<8x256xi1>, vector<8x256xf32>
    %41 = vector.extract_strided_slice %9 {offsets = [8, 0], sizes = [8, 1], strides = [1, 1]} : vector<64x1xi1> to vector<8x1xi1>
    %42 = vector.extract_strided_slice %9 {offsets = [48, 0], sizes = [8, 1], strides = [1, 1]} : vector<64x1xi1> to vector<8x1xi1>
    %43 = vector.broadcast %19 : vector<1x64xi1> to vector<8x64xi1>
    %44 = vector.broadcast %42 : vector<8x1xi1> to vector<8x64xi1>
    %45 = arith.andi %43, %44 : vector<8x64xi1>
    %cst_8 = arith.constant dense<true> : vector<1x64xi1>
    %46 = arith.xori %19, %cst_8 : vector<1x64xi1>
    %47 = vector.broadcast %46 : vector<1x64xi1> to vector<8x64xi1>
    %48 = vector.broadcast %41 : vector<8x1xi1> to vector<8x64xi1>
    %49 = arith.andi %47, %48 : vector<8x64xi1>
    %50 = arith.ori %45, %49 : vector<8x64xi1>
    %51 = vector.extract_strided_slice %7 {offsets = [40, 0], sizes = [8, 256], strides = [1, 1]} : vector<64x256xf32> to vector<8x256xf32>
    %52 = vector.extract_strided_slice %7 {offsets = [16, 0], sizes = [8, 256], strides = [1, 1]} : vector<64x256xf32> to vector<8x256xf32>
    %53 = vector.shape_cast %14 : vector<1x256xi1> to vector<1x256xi1>
    %54 = vector.broadcast %53 : vector<1x256xi1> to vector<8x256xi1>
    %55 = arith.select %54, %51, %52 : vector<8x256xi1>, vector<8x256xf32>
    %56 = vector.extract_strided_slice %9 {offsets = [16, 0], sizes = [8, 1], strides = [1, 1]} : vector<64x1xi1> to vector<8x1xi1>
    %57 = vector.extract_strided_slice %9 {offsets = [40, 0], sizes = [8, 1], strides = [1, 1]} : vector<64x1xi1> to vector<8x1xi1>
    %58 = vector.broadcast %19 : vector<1x64xi1> to vector<8x64xi1>
    %59 = vector.broadcast %57 : vector<8x1xi1> to vector<8x64xi1>
    %60 = arith.andi %58, %59 : vector<8x64xi1>
    %cst_9 = arith.constant dense<true> : vector<1x64xi1>
    %61 = arith.xori %19, %cst_9 : vector<1x64xi1>
    %62 = vector.broadcast %61 : vector<1x64xi1> to vector<8x64xi1>
    %63 = vector.broadcast %56 : vector<8x1xi1> to vector<8x64xi1>
    %64 = arith.andi %62, %63 : vector<8x64xi1>
    %65 = arith.ori %60, %64 : vector<8x64xi1>
    %66 = vector.extract_strided_slice %7 {offsets = [32, 0], sizes = [8, 256], strides = [1, 1]} : vector<64x256xf32> to vector<8x256xf32>
    %67 = vector.extract_strided_slice %7 {offsets = [24, 0], sizes = [8, 256], strides = [1, 1]} : vector<64x256xf32> to vector<8x256xf32>
    %68 = vector.shape_cast %14 : vector<1x256xi1> to vector<1x256xi1>
    %69 = vector.broadcast %68 : vector<1x256xi1> to vector<8x256xi1>
    %70 = arith.select %69, %66, %67 : vector<8x256xi1>, vector<8x256xf32>
    %71 = vector.extract_strided_slice %9 {offsets = [24, 0], sizes = [8, 1], strides = [1, 1]} : vector<64x1xi1> to vector<8x1xi1>
    %72 = vector.extract_strided_slice %9 {offsets = [32, 0], sizes = [8, 1], strides = [1, 1]} : vector<64x1xi1> to vector<8x1xi1>
    %73 = vector.broadcast %19 : vector<1x64xi1> to vector<8x64xi1>
    %74 = vector.broadcast %72 : vector<8x1xi1> to vector<8x64xi1>
    %75 = arith.andi %73, %74 : vector<8x64xi1>
    %cst_10 = arith.constant dense<true> : vector<1x64xi1>
    %76 = arith.xori %19, %cst_10 : vector<1x64xi1>
    %77 = vector.broadcast %76 : vector<1x64xi1> to vector<8x64xi1>
    %78 = vector.broadcast %71 : vector<8x1xi1> to vector<8x64xi1>
    %79 = arith.andi %77, %78 : vector<8x64xi1>
    %80 = arith.ori %75, %79 : vector<8x64xi1>
    %81 = vector.extract_strided_slice %7 {offsets = [24, 0], sizes = [8, 256], strides = [1, 1]} : vector<64x256xf32> to vector<8x256xf32>
    %82 = vector.extract_strided_slice %7 {offsets = [32, 0], sizes = [8, 256], strides = [1, 1]} : vector<64x256xf32> to vector<8x256xf32>
    %83 = vector.shape_cast %14 : vector<1x256xi1> to vector<1x256xi1>
    %84 = vector.broadcast %83 : vector<1x256xi1> to vector<8x256xi1>
    %85 = arith.select %84, %81, %82 : vector<8x256xi1>, vector<8x256xf32>
    %86 = vector.extract_strided_slice %9 {offsets = [32, 0], sizes = [8, 1], strides = [1, 1]} : vector<64x1xi1> to vector<8x1xi1>
    %87 = vector.extract_strided_slice %9 {offsets = [24, 0], sizes = [8, 1], strides = [1, 1]} : vector<64x1xi1> to vector<8x1xi1>
    %88 = vector.broadcast %19 : vector<1x64xi1> to vector<8x64xi1>
    %89 = vector.broadcast %87 : vector<8x1xi1> to vector<8x64xi1>
    %90 = arith.andi %88, %89 : vector<8x64xi1>
    %cst_11 = arith.constant dense<true> : vector<1x64xi1>
    %91 = arith.xori %19, %cst_11 : vector<1x64xi1>
    %92 = vector.broadcast %91 : vector<1x64xi1> to vector<8x64xi1>
    %93 = vector.broadcast %86 : vector<8x1xi1> to vector<8x64xi1>
    %94 = arith.andi %92, %93 : vector<8x64xi1>
    %95 = arith.ori %90, %94 : vector<8x64xi1>
    %96 = vector.extract_strided_slice %7 {offsets = [16, 0], sizes = [8, 256], strides = [1, 1]} : vector<64x256xf32> to vector<8x256xf32>
    %97 = vector.extract_strided_slice %7 {offsets = [40, 0], sizes = [8, 256], strides = [1, 1]} : vector<64x256xf32> to vector<8x256xf32>
    %98 = vector.shape_cast %14 : vector<1x256xi1> to vector<1x256xi1>
    %99 = vector.broadcast %98 : vector<1x256xi1> to vector<8x256xi1>
    %100 = arith.select %99, %96, %97 : vector<8x256xi1>, vector<8x256xf32>
    %101 = vector.extract_strided_slice %9 {offsets = [40, 0], sizes = [8, 1], strides = [1, 1]} : vector<64x1xi1> to vector<8x1xi1>
    %102 = vector.extract_strided_slice %9 {offsets = [16, 0], sizes = [8, 1], strides = [1, 1]} : vector<64x1xi1> to vector<8x1xi1>
    %103 = vector.broadcast %19 : vector<1x64xi1> to vector<8x64xi1>
    %104 = vector.broadcast %102 : vector<8x1xi1> to vector<8x64xi1>
    %105 = arith.andi %103, %104 : vector<8x64xi1>
    %cst_12 = arith.constant dense<true> : vector<1x64xi1>
    %106 = arith.xori %19, %cst_12 : vector<1x64xi1>
    %107 = vector.broadcast %106 : vector<1x64xi1> to vector<8x64xi1>
    %108 = vector.broadcast %101 : vector<8x1xi1> to vector<8x64xi1>
    %109 = arith.andi %107, %108 : vector<8x64xi1>
    %110 = arith.ori %105, %109 : vector<8x64xi1>
    %111 = vector.extract_strided_slice %7 {offsets = [8, 0], sizes = [8, 256], strides = [1, 1]} : vector<64x256xf32> to vector<8x256xf32>
    %112 = vector.extract_strided_slice %7 {offsets = [48, 0], sizes = [8, 256], strides = [1, 1]} : vector<64x256xf32> to vector<8x256xf32>
    %113 = vector.shape_cast %14 : vector<1x256xi1> to vector<1x256xi1>
    %114 = vector.broadcast %113 : vector<1x256xi1> to vector<8x256xi1>
    %115 = arith.select %114, %111, %112 : vector<8x256xi1>, vector<8x256xf32>
    %116 = vector.extract_strided_slice %9 {offsets = [48, 0], sizes = [8, 1], strides = [1, 1]} : vector<64x1xi1> to vector<8x1xi1>
    %117 = vector.extract_strided_slice %9 {offsets = [8, 0], sizes = [8, 1], strides = [1, 1]} : vector<64x1xi1> to vector<8x1xi1>
    %118 = vector.broadcast %19 : vector<1x64xi1> to vector<8x64xi1>
    %119 = vector.broadcast %117 : vector<8x1xi1> to vector<8x64xi1>
    %120 = arith.andi %118, %119 : vector<8x64xi1>
    %cst_13 = arith.constant dense<true> : vector<1x64xi1>
    %121 = arith.xori %19, %cst_13 : vector<1x64xi1>
    %122 = vector.broadcast %121 : vector<1x64xi1> to vector<8x64xi1>
    %123 = vector.broadcast %116 : vector<8x1xi1> to vector<8x64xi1>
    %124 = arith.andi %122, %123 : vector<8x64xi1>
    %125 = arith.ori %120, %124 : vector<8x64xi1>
    %126 = vector.extract_strided_slice %7 {offsets = [0, 0], sizes = [8, 256], strides = [1, 1]} : vector<64x256xf32> to vector<8x256xf32>
    %127 = vector.extract_strided_slice %7 {offsets = [56, 0], sizes = [8, 256], strides = [1, 1]} : vector<64x256xf32> to vector<8x256xf32>
    %128 = vector.shape_cast %14 : vector<1x256xi1> to vector<1x256xi1>
    %129 = vector.broadcast %128 : vector<1x256xi1> to vector<8x256xi1>
    %130 = arith.select %129, %126, %127 : vector<8x256xi1>, vector<8x256xf32>
    %131 = vector.extract_strided_slice %9 {offsets = [56, 0], sizes = [8, 1], strides = [1, 1]} : vector<64x1xi1> to vector<8x1xi1>
    %132 = vector.extract_strided_slice %9 {offsets = [0, 0], sizes = [8, 1], strides = [1, 1]} : vector<64x1xi1> to vector<8x1xi1>
    %133 = vector.broadcast %19 : vector<1x64xi1> to vector<8x64xi1>
    %134 = vector.broadcast %132 : vector<8x1xi1> to vector<8x64xi1>
    %135 = arith.andi %133, %134 : vector<8x64xi1>
    %cst_14 = arith.constant dense<true> : vector<1x64xi1>
    %136 = arith.xori %19, %cst_14 : vector<1x64xi1>
    %137 = vector.broadcast %136 : vector<1x64xi1> to vector<8x64xi1>
    %138 = vector.broadcast %131 : vector<8x1xi1> to vector<8x64xi1>
    %139 = arith.andi %137, %138 : vector<8x64xi1>
    %140 = arith.ori %135, %139 : vector<8x64xi1>
    %cst_15 = arith.constant 0.000000e+00 : f32
    %141 = vector.broadcast %cst_15 : f32 to vector<8x64xf32>
    %cst_16 = arith.constant 0.000000e+00 : f32
    %142 = vector.broadcast %cst_16 : f32 to vector<8x64xf32>
    %cst_17 = arith.constant dense<0.000000e+00> : vector<8x256xf32>
    %143 = tpu.matmul %141, %20, %cst_17 {dimension_numbers = #tpu.dot_dimension_numbers<[1], [0], [0], [1], [0, 0, 1, 1], [], []>} : vector<8x64xf32>, vector<64x256xf32>, vector<8x256xf32> -> vector<8x256xf32>
    %144 = arith.addf %25, %143 : vector<8x256xf32>
    %145 = arith.negf %144 : vector<8x256xf32>
    %146 = math.exp %145 : vector<8x256xf32>
    %cst_18 = arith.constant 1.000000e+00 : f32
    %147 = vector.broadcast %cst_18 : f32 to vector<8x256xf32>
    %148 = arith.addf %147, %146 : vector<8x256xf32>
    %149 = arith.divf %147, %148 : vector<8x256xf32>
    %150 = vector.extract_strided_slice %149 {offsets = [0, 128], sizes = [8, 64], strides = [1, 1]} : vector<8x256xf32> to vector<8x64xf32>
    %cst_19 = arith.constant 2.000000e+00 : f32
    %151 = vector.broadcast %cst_19 : f32 to vector<8x64xf32>
    %152 = arith.mulf %151, %150 : vector<8x64xf32>
    %cst_20 = arith.constant 1.000000e+00 : f32
    %153 = vector.broadcast %cst_20 : f32 to vector<8x64xf32>
    %154 = arith.subf %152, %153 : vector<8x64xf32>
    %155 = vector.extract_strided_slice %149 {offsets = [0, 64], sizes = [8, 64], strides = [1, 1]} : vector<8x256xf32> to vector<8x64xf32>
    %156 = arith.mulf %155, %142 : vector<8x64xf32>
    %157 = vector.extract_strided_slice %149 {offsets = [0, 0], sizes = [8, 64], strides = [1, 1]} : vector<8x256xf32> to vector<8x64xf32>
    %158 = arith.mulf %157, %154 : vector<8x64xf32>
    %159 = arith.addf %156, %158 : vector<8x64xf32>
    %160 = vector.extract_strided_slice %149 {offsets = [0, 192], sizes = [8, 64], strides = [1, 1]} : vector<8x256xf32> to vector<8x64xf32>
    %161 = math.tanh %159 : vector<8x64xf32>
    %162 = arith.mulf %160, %161 : vector<8x64xf32>
    %163 = arith.select %35, %159, %142 : vector<8x64xi1>, vector<8x64xf32>
    %164 = arith.select %35, %162, %141 : vector<8x64xi1>, vector<8x64xf32>
    %cst_21 = arith.constant dense<0.000000e+00> : vector<8x256xf32>
    %165 = tpu.matmul %164, %20, %cst_21 {dimension_numbers = #tpu.dot_dimension_numbers<[1], [0], [0], [1], [0, 0, 1, 1], [], []>} : vector<8x64xf32>, vector<64x256xf32>, vector<8x256xf32> -> vector<8x256xf32>
    %166 = arith.addf %40, %165 : vector<8x256xf32>
    %167 = arith.negf %166 : vector<8x256xf32>
    %168 = math.exp %167 : vector<8x256xf32>
    %cst_22 = arith.constant 1.000000e+00 : f32
    %169 = vector.broadcast %cst_22 : f32 to vector<8x256xf32>
    %170 = arith.addf %169, %168 : vector<8x256xf32>
    %171 = arith.divf %169, %170 : vector<8x256xf32>
    %172 = vector.extract_strided_slice %171 {offsets = [0, 128], sizes = [8, 64], strides = [1, 1]} : vector<8x256xf32> to vector<8x64xf32>
    %cst_23 = arith.constant 2.000000e+00 : f32
    %173 = vector.broadcast %cst_23 : f32 to vector<8x64xf32>
    %174 = arith.mulf %173, %172 : vector<8x64xf32>
    %cst_24 = arith.constant 1.000000e+00 : f32
    %175 = vector.broadcast %cst_24 : f32 to vector<8x64xf32>
    %176 = arith.subf %174, %175 : vector<8x64xf32>
    %177 = vector.extract_strided_slice %171 {offsets = [0, 64], sizes = [8, 64], strides = [1, 1]} : vector<8x256xf32> to vector<8x64xf32>
    %178 = arith.mulf %177, %163 : vector<8x64xf32>
    %179 = vector.extract_strided_slice %171 {offsets = [0, 0], sizes = [8, 64], strides = [1, 1]} : vector<8x256xf32> to vector<8x64xf32>
    %180 = arith.mulf %179, %176 : vector<8x64xf32>
    %181 = arith.addf %178, %180 : vector<8x64xf32>
    %182 = vector.extract_strided_slice %171 {offsets = [0, 192], sizes = [8, 64], strides = [1, 1]} : vector<8x256xf32> to vector<8x64xf32>
    %183 = math.tanh %181 : vector<8x64xf32>
    %184 = arith.mulf %182, %183 : vector<8x64xf32>
    %185 = arith.select %50, %181, %163 : vector<8x64xi1>, vector<8x64xf32>
    %186 = arith.select %50, %184, %164 : vector<8x64xi1>, vector<8x64xf32>
    %cst_25 = arith.constant dense<0.000000e+00> : vector<8x256xf32>
    %187 = tpu.matmul %186, %20, %cst_25 {dimension_numbers = #tpu.dot_dimension_numbers<[1], [0], [0], [1], [0, 0, 1, 1], [], []>} : vector<8x64xf32>, vector<64x256xf32>, vector<8x256xf32> -> vector<8x256xf32>
    %188 = arith.addf %55, %187 : vector<8x256xf32>
    %189 = arith.negf %188 : vector<8x256xf32>
    %190 = math.exp %189 : vector<8x256xf32>
    %cst_26 = arith.constant 1.000000e+00 : f32
    %191 = vector.broadcast %cst_26 : f32 to vector<8x256xf32>
    %192 = arith.addf %191, %190 : vector<8x256xf32>
    %193 = arith.divf %191, %192 : vector<8x256xf32>
    %194 = vector.extract_strided_slice %193 {offsets = [0, 128], sizes = [8, 64], strides = [1, 1]} : vector<8x256xf32> to vector<8x64xf32>
    %cst_27 = arith.constant 2.000000e+00 : f32
    %195 = vector.broadcast %cst_27 : f32 to vector<8x64xf32>
    %196 = arith.mulf %195, %194 : vector<8x64xf32>
    %cst_28 = arith.constant 1.000000e+00 : f32
    %197 = vector.broadcast %cst_28 : f32 to vector<8x64xf32>
    %198 = arith.subf %196, %197 : vector<8x64xf32>
    %199 = vector.extract_strided_slice %193 {offsets = [0, 64], sizes = [8, 64], strides = [1, 1]} : vector<8x256xf32> to vector<8x64xf32>
    %200 = arith.mulf %199, %185 : vector<8x64xf32>
    %201 = vector.extract_strided_slice %193 {offsets = [0, 0], sizes = [8, 64], strides = [1, 1]} : vector<8x256xf32> to vector<8x64xf32>
    %202 = arith.mulf %201, %198 : vector<8x64xf32>
    %203 = arith.addf %200, %202 : vector<8x64xf32>
    %204 = vector.extract_strided_slice %193 {offsets = [0, 192], sizes = [8, 64], strides = [1, 1]} : vector<8x256xf32> to vector<8x64xf32>
    %205 = math.tanh %203 : vector<8x64xf32>
    %206 = arith.mulf %204, %205 : vector<8x64xf32>
    %207 = arith.select %65, %203, %185 : vector<8x64xi1>, vector<8x64xf32>
    %208 = arith.select %65, %206, %186 : vector<8x64xi1>, vector<8x64xf32>
    %cst_29 = arith.constant dense<0.000000e+00> : vector<8x256xf32>
    %209 = tpu.matmul %208, %20, %cst_29 {dimension_numbers = #tpu.dot_dimension_numbers<[1], [0], [0], [1], [0, 0, 1, 1], [], []>} : vector<8x64xf32>, vector<64x256xf32>, vector<8x256xf32> -> vector<8x256xf32>
    %210 = arith.addf %70, %209 : vector<8x256xf32>
    %211 = arith.negf %210 : vector<8x256xf32>
    %212 = math.exp %211 : vector<8x256xf32>
    %cst_30 = arith.constant 1.000000e+00 : f32
    %213 = vector.broadcast %cst_30 : f32 to vector<8x256xf32>
    %214 = arith.addf %213, %212 : vector<8x256xf32>
    %215 = arith.divf %213, %214 : vector<8x256xf32>
    %216 = vector.extract_strided_slice %215 {offsets = [0, 128], sizes = [8, 64], strides = [1, 1]} : vector<8x256xf32> to vector<8x64xf32>
    %cst_31 = arith.constant 2.000000e+00 : f32
    %217 = vector.broadcast %cst_31 : f32 to vector<8x64xf32>
    %218 = arith.mulf %217, %216 : vector<8x64xf32>
    %cst_32 = arith.constant 1.000000e+00 : f32
    %219 = vector.broadcast %cst_32 : f32 to vector<8x64xf32>
    %220 = arith.subf %218, %219 : vector<8x64xf32>
    %221 = vector.extract_strided_slice %215 {offsets = [0, 64], sizes = [8, 64], strides = [1, 1]} : vector<8x256xf32> to vector<8x64xf32>
    %222 = arith.mulf %221, %207 : vector<8x64xf32>
    %223 = vector.extract_strided_slice %215 {offsets = [0, 0], sizes = [8, 64], strides = [1, 1]} : vector<8x256xf32> to vector<8x64xf32>
    %224 = arith.mulf %223, %220 : vector<8x64xf32>
    %225 = arith.addf %222, %224 : vector<8x64xf32>
    %226 = vector.extract_strided_slice %215 {offsets = [0, 192], sizes = [8, 64], strides = [1, 1]} : vector<8x256xf32> to vector<8x64xf32>
    %227 = math.tanh %225 : vector<8x64xf32>
    %228 = arith.mulf %226, %227 : vector<8x64xf32>
    %229 = arith.select %80, %225, %207 : vector<8x64xi1>, vector<8x64xf32>
    %230 = arith.select %80, %228, %208 : vector<8x64xi1>, vector<8x64xf32>
    %cst_33 = arith.constant dense<0.000000e+00> : vector<8x256xf32>
    %231 = tpu.matmul %230, %20, %cst_33 {dimension_numbers = #tpu.dot_dimension_numbers<[1], [0], [0], [1], [0, 0, 1, 1], [], []>} : vector<8x64xf32>, vector<64x256xf32>, vector<8x256xf32> -> vector<8x256xf32>
    %232 = arith.addf %85, %231 : vector<8x256xf32>
    %233 = arith.negf %232 : vector<8x256xf32>
    %234 = math.exp %233 : vector<8x256xf32>
    %cst_34 = arith.constant 1.000000e+00 : f32
    %235 = vector.broadcast %cst_34 : f32 to vector<8x256xf32>
    %236 = arith.addf %235, %234 : vector<8x256xf32>
    %237 = arith.divf %235, %236 : vector<8x256xf32>
    %238 = vector.extract_strided_slice %237 {offsets = [0, 128], sizes = [8, 64], strides = [1, 1]} : vector<8x256xf32> to vector<8x64xf32>
    %cst_35 = arith.constant 2.000000e+00 : f32
    %239 = vector.broadcast %cst_35 : f32 to vector<8x64xf32>
    %240 = arith.mulf %239, %238 : vector<8x64xf32>
    %cst_36 = arith.constant 1.000000e+00 : f32
    %241 = vector.broadcast %cst_36 : f32 to vector<8x64xf32>
    %242 = arith.subf %240, %241 : vector<8x64xf32>
    %243 = vector.extract_strided_slice %237 {offsets = [0, 64], sizes = [8, 64], strides = [1, 1]} : vector<8x256xf32> to vector<8x64xf32>
    %244 = arith.mulf %243, %229 : vector<8x64xf32>
    %245 = vector.extract_strided_slice %237 {offsets = [0, 0], sizes = [8, 64], strides = [1, 1]} : vector<8x256xf32> to vector<8x64xf32>
    %246 = arith.mulf %245, %242 : vector<8x64xf32>
    %247 = arith.addf %244, %246 : vector<8x64xf32>
    %248 = vector.extract_strided_slice %237 {offsets = [0, 192], sizes = [8, 64], strides = [1, 1]} : vector<8x256xf32> to vector<8x64xf32>
    %249 = math.tanh %247 : vector<8x64xf32>
    %250 = arith.mulf %248, %249 : vector<8x64xf32>
    %251 = arith.select %95, %247, %229 : vector<8x64xi1>, vector<8x64xf32>
    %252 = arith.select %95, %250, %230 : vector<8x64xi1>, vector<8x64xf32>
    %cst_37 = arith.constant dense<0.000000e+00> : vector<8x256xf32>
    %253 = tpu.matmul %252, %20, %cst_37 {dimension_numbers = #tpu.dot_dimension_numbers<[1], [0], [0], [1], [0, 0, 1, 1], [], []>} : vector<8x64xf32>, vector<64x256xf32>, vector<8x256xf32> -> vector<8x256xf32>
    %254 = arith.addf %100, %253 : vector<8x256xf32>
    %255 = arith.negf %254 : vector<8x256xf32>
    %256 = math.exp %255 : vector<8x256xf32>
    %cst_38 = arith.constant 1.000000e+00 : f32
    %257 = vector.broadcast %cst_38 : f32 to vector<8x256xf32>
    %258 = arith.addf %257, %256 : vector<8x256xf32>
    %259 = arith.divf %257, %258 : vector<8x256xf32>
    %260 = vector.extract_strided_slice %259 {offsets = [0, 128], sizes = [8, 64], strides = [1, 1]} : vector<8x256xf32> to vector<8x64xf32>
    %cst_39 = arith.constant 2.000000e+00 : f32
    %261 = vector.broadcast %cst_39 : f32 to vector<8x64xf32>
    %262 = arith.mulf %261, %260 : vector<8x64xf32>
    %cst_40 = arith.constant 1.000000e+00 : f32
    %263 = vector.broadcast %cst_40 : f32 to vector<8x64xf32>
    %264 = arith.subf %262, %263 : vector<8x64xf32>
    %265 = vector.extract_strided_slice %259 {offsets = [0, 64], sizes = [8, 64], strides = [1, 1]} : vector<8x256xf32> to vector<8x64xf32>
    %266 = arith.mulf %265, %251 : vector<8x64xf32>
    %267 = vector.extract_strided_slice %259 {offsets = [0, 0], sizes = [8, 64], strides = [1, 1]} : vector<8x256xf32> to vector<8x64xf32>
    %268 = arith.mulf %267, %264 : vector<8x64xf32>
    %269 = arith.addf %266, %268 : vector<8x64xf32>
    %270 = vector.extract_strided_slice %259 {offsets = [0, 192], sizes = [8, 64], strides = [1, 1]} : vector<8x256xf32> to vector<8x64xf32>
    %271 = math.tanh %269 : vector<8x64xf32>
    %272 = arith.mulf %270, %271 : vector<8x64xf32>
    %273 = arith.select %110, %269, %251 : vector<8x64xi1>, vector<8x64xf32>
    %274 = arith.select %110, %272, %252 : vector<8x64xi1>, vector<8x64xf32>
    %cst_41 = arith.constant dense<0.000000e+00> : vector<8x256xf32>
    %275 = tpu.matmul %274, %20, %cst_41 {dimension_numbers = #tpu.dot_dimension_numbers<[1], [0], [0], [1], [0, 0, 1, 1], [], []>} : vector<8x64xf32>, vector<64x256xf32>, vector<8x256xf32> -> vector<8x256xf32>
    %276 = arith.addf %115, %275 : vector<8x256xf32>
    %277 = arith.negf %276 : vector<8x256xf32>
    %278 = math.exp %277 : vector<8x256xf32>
    %cst_42 = arith.constant 1.000000e+00 : f32
    %279 = vector.broadcast %cst_42 : f32 to vector<8x256xf32>
    %280 = arith.addf %279, %278 : vector<8x256xf32>
    %281 = arith.divf %279, %280 : vector<8x256xf32>
    %282 = vector.extract_strided_slice %281 {offsets = [0, 128], sizes = [8, 64], strides = [1, 1]} : vector<8x256xf32> to vector<8x64xf32>
    %cst_43 = arith.constant 2.000000e+00 : f32
    %283 = vector.broadcast %cst_43 : f32 to vector<8x64xf32>
    %284 = arith.mulf %283, %282 : vector<8x64xf32>
    %cst_44 = arith.constant 1.000000e+00 : f32
    %285 = vector.broadcast %cst_44 : f32 to vector<8x64xf32>
    %286 = arith.subf %284, %285 : vector<8x64xf32>
    %287 = vector.extract_strided_slice %281 {offsets = [0, 64], sizes = [8, 64], strides = [1, 1]} : vector<8x256xf32> to vector<8x64xf32>
    %288 = arith.mulf %287, %273 : vector<8x64xf32>
    %289 = vector.extract_strided_slice %281 {offsets = [0, 0], sizes = [8, 64], strides = [1, 1]} : vector<8x256xf32> to vector<8x64xf32>
    %290 = arith.mulf %289, %286 : vector<8x64xf32>
    %291 = arith.addf %288, %290 : vector<8x64xf32>
    %292 = vector.extract_strided_slice %281 {offsets = [0, 192], sizes = [8, 64], strides = [1, 1]} : vector<8x256xf32> to vector<8x64xf32>
    %293 = math.tanh %291 : vector<8x64xf32>
    %294 = arith.mulf %292, %293 : vector<8x64xf32>
    %295 = arith.select %125, %291, %273 : vector<8x64xi1>, vector<8x64xf32>
    %296 = arith.select %125, %294, %274 : vector<8x64xi1>, vector<8x64xf32>
    %cst_45 = arith.constant dense<0.000000e+00> : vector<8x256xf32>
    %297 = tpu.matmul %296, %20, %cst_45 {dimension_numbers = #tpu.dot_dimension_numbers<[1], [0], [0], [1], [0, 0, 1, 1], [], []>} : vector<8x64xf32>, vector<64x256xf32>, vector<8x256xf32> -> vector<8x256xf32>
    %298 = arith.addf %130, %297 : vector<8x256xf32>
    %299 = arith.negf %298 : vector<8x256xf32>
    %300 = math.exp %299 : vector<8x256xf32>
    %cst_46 = arith.constant 1.000000e+00 : f32
    %301 = vector.broadcast %cst_46 : f32 to vector<8x256xf32>
    %302 = arith.addf %301, %300 : vector<8x256xf32>
    %303 = arith.divf %301, %302 : vector<8x256xf32>
    %304 = vector.extract_strided_slice %303 {offsets = [0, 128], sizes = [8, 64], strides = [1, 1]} : vector<8x256xf32> to vector<8x64xf32>
    %cst_47 = arith.constant 2.000000e+00 : f32
    %305 = vector.broadcast %cst_47 : f32 to vector<8x64xf32>
    %306 = arith.mulf %305, %304 : vector<8x64xf32>
    %cst_48 = arith.constant 1.000000e+00 : f32
    %307 = vector.broadcast %cst_48 : f32 to vector<8x64xf32>
    %308 = arith.subf %306, %307 : vector<8x64xf32>
    %309 = vector.extract_strided_slice %303 {offsets = [0, 64], sizes = [8, 64], strides = [1, 1]} : vector<8x256xf32> to vector<8x64xf32>
    %310 = arith.mulf %309, %295 : vector<8x64xf32>
    %311 = vector.extract_strided_slice %303 {offsets = [0, 0], sizes = [8, 64], strides = [1, 1]} : vector<8x256xf32> to vector<8x64xf32>
    %312 = arith.mulf %311, %308 : vector<8x64xf32>
    %313 = arith.addf %310, %312 : vector<8x64xf32>
    %314 = vector.extract_strided_slice %303 {offsets = [0, 192], sizes = [8, 64], strides = [1, 1]} : vector<8x256xf32> to vector<8x64xf32>
    %315 = math.tanh %313 : vector<8x64xf32>
    %316 = arith.mulf %314, %315 : vector<8x64xf32>
    %317 = arith.select %140, %316, %296 : vector<8x64xi1>, vector<8x64xf32>
    %c192 = arith.constant 192 : index
    %c0_49 = arith.constant 0 : index
    %318 = vector.load %arg1[%c192, %c0_49] : memref<264x256xf32, #tpu.memory_space<vmem>>, vector<64x64xf32>
    %c192_50 = arith.constant 192 : index
    %c128_51 = arith.constant 128 : index
    %319 = vector.load %arg1[%c192_50, %c128_51] : memref<264x256xf32, #tpu.memory_space<vmem>>, vector<64x16xf32>
    %c256 = arith.constant 256 : index
    %c0_52 = arith.constant 0 : index
    %320 = vector.load %arg1[%c256, %c0_52] : memref<264x256xf32, #tpu.memory_space<vmem>>, vector<1x64xf32>
    %c256_53 = arith.constant 256 : index
    %c128_54 = arith.constant 128 : index
    %321 = vector.load %arg1[%c256_53, %c128_54] : memref<264x256xf32, #tpu.memory_space<vmem>>, vector<1x16xf32>
    %cst_55 = arith.constant dense<0.000000e+00> : vector<8x64xf32>
    %322 = tpu.matmul %317, %318, %cst_55 {dimension_numbers = #tpu.dot_dimension_numbers<[1], [0], [0], [1], [0, 0, 1, 1], [], []>} : vector<8x64xf32>, vector<64x64xf32>, vector<8x64xf32> -> vector<8x64xf32>
    %323 = vector.broadcast %320 : vector<1x64xf32> to vector<8x64xf32>
    %324 = arith.addf %322, %323 : vector<8x64xf32>
    %cst_56 = arith.constant 0.000000e+00 : f32
    %325 = vector.broadcast %cst_56 : f32 to vector<8x64xf32>
    %326 = arith.maximumf %324, %325 : vector<8x64xf32>
    %cst_57 = arith.constant dense<0.000000e+00> : vector<8x16xf32>
    %327 = tpu.matmul %326, %319, %cst_57 {dimension_numbers = #tpu.dot_dimension_numbers<[1], [0], [0], [1], [0, 0, 1, 1], [], []>} : vector<8x64xf32>, vector<64x16xf32>, vector<8x16xf32> -> vector<8x16xf32>
    %328 = vector.broadcast %321 : vector<1x16xf32> to vector<8x16xf32>
    %329 = arith.addf %327, %328 : vector<8x16xf32>
    %c0_58 = arith.constant 0 : index
    %c0_59 = arith.constant 0 : index
    %330 = vector.load %arg2[%c0_58, %c0_59] : memref<8x16xf32, #tpu.memory_space<vmem>>, vector<8x16xf32>
    tpu.vector_store %arg2[%c0_58, %c0_59], %329 {strides = array<i32>} : memref<8x16xf32, #tpu.memory_space<vmem>>, vector<8x16xf32>,
    return
  }
}

</mosaic_0001>

<llo_original>
// kernel: tpu_custom_call.1
$region0: #{tpu_custom_call.1}
  #allocation0 [shape = 'u32[]', space=smem, size = 0x4, offset = 0x4, fixed_abs, tag = 'smem constant byte address 0x4 - core index']
  #allocation1 [shape = 'u32[72,128]{1,0:T(1,128)}', space=vmem, size = 0x9000, scoped, tag = 'internal scratch']
  %s0 = inlined_call_operand.vmem [shape: s32[64,1], index: 0, kind: input, shape index: {}]
  %s1 = inlined_call_operand.hbm [shape: f32[264,256], index: 1, kind: input, shape index: {}]
  %s2 = inlined_call_operand.hbm [shape: f32[8,16], index: 2, kind: output, shape index: {}]
  %s3 = sld [smem:[#allocation0]]
  $region22: #{tpu_custom_call.1} parent=0
    _
  %s5 = ssub.s32 1, %s3
  %s6 = scalar_select 0, %s5, %s3
  $region1: #{tpu_custom_call.1} parent=0
    #allocation2 [shape = 'u8[270336]{0}', space=vmem, size = 0x42000, scoped, tag = 'input window, operand 1, single buffered']
    #allocation3 [shape = 's32[1]{0}', space=sflag, size = 0x4, scoped, tag = 'scoped memory for tpu_custom_call.1']
    #allocation4 [shape = 's32[1]{0}', space=sflag, size = 0x4, scoped, tag = 'scoped memory for tpu_custom_call.1']
    #allocation5 [shape = 'u8[4096]{0}', space=vmem, size = 0x1000, scoped, tag = 'output window, operand 0, single buffered']
    %7 = vsyncpa [#allocation3], 0
    %8 = vsyncpa [#allocation4], 0
    // Predicated region
    $region2: #{tpu_custom_call.1} parent=1 // pred_check
      _
    $region3: #{tpu_custom_call.1} parent=1 // pred_check_branch
      %10 = sbr.rel (0) target = $region5
    $region4: #{tpu_custom_call.1} parent=1 // pred_region
      _
    $region5: #{tpu_custom_call.1} parent=1 // pred_fallthru
      _
    // Predicated region
    $region6: #{tpu_custom_call.1} parent=1 // pred_check
      _
    $region7: #{tpu_custom_call.1} parent=1 // pred_check_branch
      %12 = sbr.rel (0) target = $region9
    $region8: #{tpu_custom_call.1} parent=1 // pred_region
      %14 = vsyncadd [#allocation3], 0
      %s15 = sshll.u32 %s1, 4
      %s16 = int_to_ptr.hbm [resolvable:$true] %s15
      %s17 = sshll.u32 [#allocation2], 4
      %s18 = int_to_ptr.vmem [resolvable:$true] %s17
      %23 = dma.hbm_to_vmem [thread:$0]  %s16, 8448, %s18, [#allocation3], 256, 256, 16
    $region9: #{tpu_custom_call.1} parent=1 // pred_fallthru
      _
    // Predicated region
    $region10: #{tpu_custom_call.1} parent=1 // pred_check
      _
    $region11: #{tpu_custom_call.1} parent=1 // pred_check_branch
      %25 = sbr.rel (0) target = $region13
    $region12: #{tpu_custom_call.1} parent=1 // pred_region
      %27 = dma.done [#allocation3], 8448
    $region13: #{tpu_custom_call.1} parent=1 // pred_fallthru
      _
    %v28 = vld [vmem:[%s0] sm:$0xff]
    %v29 = vld [vmem:[%s0 + $0x8] sm:$0xff]
    %v30 = vld [vmem:[%s0 + $0x10] sm:$0xff]
    %v31 = vld [vmem:[%s0 + $0x18] sm:$0xff]
    %v32 = vld [vmem:[%s0 + $0x20] sm:$0xff]
    %v33 = vld [vmem:[%s0 + $0x28] sm:$0xff]
    %v34 = vld [vmem:[%s0 + $0x30] sm:$0xff]
    %v35 = vld [vmem:[%s0 + $0x38] sm:$0xff]
    %v36 = vlaneseq
    %v37 = vand.u32 %v36, 127
    %38 = vset.pattern.permute.xlu0 0
    %39 = vperm.xlu0 %38, %v28
    %v40 = vpop.permute.xlu0 %39
    %41 = vset.pattern.permute.xlu0 0
    %42 = vperm.xlu0 %41, %v29
    %v43 = vpop.permute.xlu0 %42
    %44 = vset.pattern.permute.xlu0 0
    %45 = vperm.xlu0 %44, %v30
    %v46 = vpop.permute.xlu0 %45
    %47 = vset.pattern.permute.xlu0 0
    %48 = vperm.xlu0 %47, %v31
    %v49 = vpop.permute.xlu0 %48
    %50 = vset.pattern.permute.xlu0 0
    %51 = vperm.xlu0 %50, %v32
    %v52 = vpop.permute.xlu0 %51
    %53 = vset.pattern.permute.xlu0 0
    %54 = vperm.xlu0 %53, %v33
    %v55 = vpop.permute.xlu0 %54
    %56 = vset.pattern.permute.xlu0 0
    %57 = vperm.xlu0 %56, %v34
    %v58 = vpop.permute.xlu0 %57
    %59 = vset.pattern.permute.xlu0 0
    %60 = vperm.xlu0 %59, %v35
    %v61 = vpop.permute.xlu0 %60
    %vm62 = vcmp.eq.s32.totalorder %v37, %v40
    %vm63 = vcmp.eq.s32.totalorder %v37, %v43
    %vm64 = vcmp.eq.s32.totalorder %v37, %v46
    %vm65 = vcmp.eq.s32.totalorder %v37, %v49
    %vm66 = vcmp.eq.s32.totalorder %v37, %v52
    %vm67 = vcmp.eq.s32.totalorder %v37, %v55
    %vm68 = vcmp.eq.s32.totalorder %v37, %v58
    %vm69 = vcmp.eq.s32.totalorder %v37, %v61
    %v70 = vsel %vm62, 1, 0
    %v71 = vsel %vm63, 1, 0
    %v72 = vsel %vm64, 1, 0
    %v73 = vsel %vm65, 1, 0
    %v74 = vsel %vm66, 1, 0
    %v75 = vsel %vm67, 1, 0
    %v76 = vsel %vm68, 1, 0
    %v77 = vsel %vm69, 1, 0
    %v78 = vcvt.s32.f32 %v70
    %v79 = vcvt.s32.f32 %v71
    %v80 = vcvt.s32.f32 %v72
    %v81 = vcvt.s32.f32 %v73
    %v82 = vcvt.s32.f32 %v74
    %v83 = vcvt.s32.f32 %v75
    %v84 = vcvt.s32.f32 %v76
    %v85 = vcvt.s32.f32 %v77
    %v86 = vld [vmem:[#allocation2] sm:$0xff]
    %v87 = vld [vmem:[#allocation2 + $0x8] sm:$0xff]
    %v88 = vld [vmem:[#allocation2 + $0x10] sm:$0xff]
    %v89 = vld [vmem:[#allocation2 + $0x18] sm:$0xff]
    %v90 = vld [vmem:[#allocation2 + $0x20] sm:$0xff]
    %v91 = vld [vmem:[#allocation2 + $0x28] sm:$0xff]
    %v92 = vld [vmem:[#allocation2 + $0x30] sm:$0xff]
    %v93 = vld [vmem:[#allocation2 + $0x38] sm:$0xff]
    %v94 = vld [vmem:[#allocation2 + $0x40] sm:$0xff]
    %v95 = vld [vmem:[#allocation2 + $0x48] sm:$0xff]
    %v96 = vld [vmem:[#allocation2 + $0x50] sm:$0xff]
    %v97 = vld [vmem:[#allocation2 + $0x58] sm:$0xff]
    %v98 = vld [vmem:[#allocation2 + $0x60] sm:$0xff]
    %v99 = vld [vmem:[#allocation2 + $0x68] sm:$0xff]
    %v100 = vld [vmem:[#allocation2 + $0x70] sm:$0xff]
    %v101 = vld [vmem:[#allocation2 + $0x78] sm:$0xff]
    %v102 = vld [vmem:[#allocation2 + $0x80] sm:$0xff]
    %v103 = vld [vmem:[#allocation2 + $0x88] sm:$0xff]
    %v104 = vld [vmem:[#allocation2 + $0x90] sm:$0xff]
    %v105 = vld [vmem:[#allocation2 + $0x98] sm:$0xff]
    %v106 = vld [vmem:[#allocation2 + $0xa0] sm:$0xff]
    %v107 = vld [vmem:[#allocation2 + $0xa8] sm:$0xff]
    %v108 = vld [vmem:[#allocation2 + $0xb0] sm:$0xff]
    %v109 = vld [vmem:[#allocation2 + $0xb8] sm:$0xff]
    %v110 = vld [vmem:[#allocation2 + $0xc0] sm:$0xff]
    %v111 = vld [vmem:[#allocation2 + $0xc8] sm:$0xff]
    %v112 = vld [vmem:[#allocation2 + $0xd0] sm:$0xff]
    %v113 = vld [vmem:[#allocation2 + $0xd8] sm:$0xff]
    %v114 = vld [vmem:[#allocation2 + $0xe0] sm:$0xff]
    %v115 = vld [vmem:[#allocation2 + $0xe8] sm:$0xff]
    %v116 = vld [vmem:[#allocation2 + $0xf0] sm:$0xff]
    %v117 = vld [vmem:[#allocation2 + $0xf8] sm:$0xff]
    %118 = vmatpush.msra.mxu0 %v116
    %119 = vmatpush.msra.mxu0 %v114
    %120 = vmatpush.msra.mxu0 %v112
    %121 = vmatpush.msra.mxu0 %v110
    %122 = vmatpush.msra.mxu0 %v108
    %123 = vmatpush.msra.mxu0 %v106
    %124 = vmatpush.msra.mxu0 %v104
    %125 = vmatpush.msra.mxu0 %v102
    %126 = vmatpush.msra.mxu0 %v100
    %127 = vmatpush.msra.mxu0 %v98
    %128 = vmatpush.msra.mxu0 %v96
    %129 = vmatpush.msra.mxu0 %v94
    %130 = vmatpush.msra.mxu0 %v92
    %131 = vmatpush.msra.mxu0 %v90
    %132 = vmatpush.msra.mxu0 %v88
    %133 = vmatpush.msra.mxu0 %v86
    %134 = vmatmul.f32.gmra.mxu0 %v78
    %v135 = vpop.f32.mrf.mxu0
    %v136 = vadd.f32 0.0, %v135
    %137 = vmatmul.f32.gmra.mxu0 %v79
    %v138 = vpop.f32.mrf.mxu0
    %v139 = vadd.f32 0.0, %v138
    %140 = vmatmul.f32.gmra.mxu0 %v80
    %v141 = vpop.f32.mrf.mxu0
    %v142 = vadd.f32 0.0, %v141
    %143 = vmatmul.f32.gmra.mxu0 %v81
    %v144 = vpop.f32.mrf.mxu0
    %v145 = vadd.f32 0.0, %v144
    %146 = vmatmul.f32.gmra.mxu0 %v82
    %v147 = vpop.f32.mrf.mxu0
    %v148 = vadd.f32 0.0, %v147
    %149 = vmatmul.f32.gmra.mxu0 %v83
    %v150 = vpop.f32.mrf.mxu0
    %v151 = vadd.f32 0.0, %v150
    %152 = vmatmul.f32.gmra.mxu0 %v84
    %v153 = vpop.f32.mrf.mxu0
    %v154 = vadd.f32 0.0, %v153
    %155 = vmatmul.f32.gmra.mxu0 %v85
    %v156 = vpop.f32.mrf.mxu0
    %v157 = vadd.f32 0.0, %v156
    %158 = vdwg.mxu0
    %159 = vmatpush.msra.mxu0 %v117
    %160 = vmatpush.msra.mxu0 %v115
    %161 = vmatpush.msra.mxu0 %v113
    %162 = vmatpush.msra.mxu0 %v111
    %163 = vmatpush.msra.mxu0 %v109
    %164 = vmatpush.msra.mxu0 %v107
    %165 = vmatpush.msra.mxu0 %v105
    %166 = vmatpush.msra.mxu0 %v103
    %167 = vmatpush.msra.mxu0 %v101
    %168 = vmatpush.msra.mxu0 %v99
    %169 = vmatpush.msra.mxu0 %v97
    %170 = vmatpush.msra.mxu0 %v95
    %171 = vmatpush.msra.mxu0 %v93
    %172 = vmatpush.msra.mxu0 %v91
    %173 = vmatpush.msra.mxu0 %v89
    %174 = vmatpush.msra.mxu0 %v87
    %175 = vmatmul.f32.gmra.mxu0 %v78
    %v176 = vpop.f32.mrf.mxu0
    %v177 = vadd.f32 0.0, %v176
    %178 = vmatmul.f32.gmra.mxu0 %v79
    %v179 = vpop.f32.mrf.mxu0
    %v180 = vadd.f32 0.0, %v179
    %181 = vmatmul.f32.gmra.mxu0 %v80
    %v182 = vpop.f32.mrf.mxu0
    %v183 = vadd.f32 0.0, %v182
    %184 = vmatmul.f32.gmra.mxu0 %v81
    %v185 = vpop.f32.mrf.mxu0
    %v186 = vadd.f32 0.0, %v185
    %187 = vmatmul.f32.gmra.mxu0 %v82
    %v188 = vpop.f32.mrf.mxu0
    %v189 = vadd.f32 0.0, %v188
    %190 = vmatmul.f32.gmra.mxu0 %v83
    %v191 = vpop.f32.mrf.mxu0
    %v192 = vadd.f32 0.0, %v191
    %193 = vmatmul.f32.gmra.mxu0 %v84
    %v194 = vpop.f32.mrf.mxu0
    %v195 = vadd.f32 0.0, %v194
    %196 = vmatmul.f32.gmra.mxu0 %v85
    %v197 = vpop.f32.mrf.mxu0
    %v198 = vadd.f32 0.0, %v197
    %199 = vdwg.mxu0
    %vm200 = vcmp.ne.s32.totalorder %v28, 0
    %vm201 = vcmp.ne.s32.totalorder %v29, 0
    %vm202 = vcmp.ne.s32.totalorder %v30, 0
    %vm203 = vcmp.ne.s32.totalorder %v31, 0
    %vm204 = vcmp.ne.s32.totalorder %v32, 0
    %vm205 = vcmp.ne.s32.totalorder %v33, 0
    %vm206 = vcmp.ne.s32.totalorder %v34, 0
    %vm207 = vcmp.ne.s32.totalorder %v35, 0
    %v208 = vadd.s32 %v37, 128
    %v209 = vand.u32 %v37, 32
    %v210 = vand.u32 %v208, 32
    %vm211 = vcmp.ne.s32.totalorder %v209, 0
    %vm212 = vcmp.ne.s32.totalorder %v210, 0
    %v213 = vld [vmem:[#allocation2 + $0x100] sm:$0xff]
    %v214 = vld [vmem:[#allocation2 + $0x108] sm:$0xff]
    %v215 = vld [vmem:[#allocation2 + $0x110] sm:$0xff]
    %v216 = vld [vmem:[#allocation2 + $0x118] sm:$0xff]
    %v217 = vld [vmem:[#allocation2 + $0x120] sm:$0xff]
    %v218 = vld [vmem:[#allocation2 + $0x128] sm:$0xff]
    %v219 = vld [vmem:[#allocation2 + $0x130] sm:$0xff]
    %v220 = vld [vmem:[#allocation2 + $0x138] sm:$0xff]
    %v221 = vld [vmem:[#allocation2 + $0x140] sm:$0xff]
    %v222 = vld [vmem:[#allocation2 + $0x148] sm:$0xff]
    %v223 = vld [vmem:[#allocation2 + $0x150] sm:$0xff]
    %v224 = vld [vmem:[#allocation2 + $0x158] sm:$0xff]
    %v225 = vld [vmem:[#allocation2 + $0x160] sm:$0xff]
    %v226 = vld [vmem:[#allocation2 + $0x168] sm:$0xff]
    %v227 = vld [vmem:[#allocation2 + $0x170] sm:$0xff]
    %v228 = vld [vmem:[#allocation2 + $0x178] sm:$0xff]
    %v229 = vsel %vm211, 1, 0
    %v230 = vsel %vm212, 1, 0
    %vm231 = vcmp.eq.s32.totalorder %v229, 1
    %vm232 = vcmp.eq.s32.totalorder %v230, 1
    %v233 = vsel %vm231, %v157, %v136
    %v234 = vsel %vm232, %v198, %v177
    %v235 = vsel %vm207, 1, 0
    %236 = vset.pattern.permute.xlu0 0
    %237 = vperm.xlu0 %236, %v235
    %v238 = vpop.permute.xlu0 %237
    %vm239 = vcmp.eq.s32.totalorder %v238, 1
    %vm240 = vmand %vm231, %vm239
    %vm241 = vmxor %vm211, 1
    %v242 = vsel %vm241, 1, 0
    %vm243 = vcmp.eq.s32.totalorder %v242, 1
    %v244 = vsel %vm200, 1, 0
    %245 = vset.pattern.permute.xlu0 0
    %246 = vperm.xlu0 %245, %v244
    %v247 = vpop.permute.xlu0 %246
    %vm248 = vcmp.eq.s32.totalorder %v247, 1
    %vm249 = vmand %vm243, %vm248
    %vm250 = vmor %vm240, %vm249
    %v251 = vsel %vm231, %v154, %v139
    %v252 = vsel %vm232, %v195, %v180
    %v253 = vsel %vm206, 1, 0
    %254 = vset.pattern.permute.xlu0 0
    %255 = vperm.xlu0 %254, %v253
    %v256 = vpop.permute.xlu0 %255
    %vm257 = vcmp.eq.s32.totalorder %v256, 1
    %vm258 = vmand %vm231, %vm257
    %v259 = vsel %vm201, 1, 0
    %260 = vset.pattern.permute.xlu0 0
    %261 = vperm.xlu0 %260, %v259
    %v262 = vpop.permute.xlu0 %261
    %vm263 = vcmp.eq.s32.totalorder %v262, 1
    %vm264 = vmand %vm243, %vm263
    %vm265 = vmor %vm258, %vm264
    %v266 = vsel %vm231, %v151, %v142
    %v267 = vsel %vm232, %v192, %v183
    %v268 = vsel %vm205, 1, 0
    %269 = vset.pattern.permute.xlu0 0
    %270 = vperm.xlu0 %269, %v268
    %v271 = vpop.permute.xlu0 %270
    %vm272 = vcmp.eq.s32.totalorder %v271, 1
    %vm273 = vmand %vm231, %vm272
    %v274 = vsel %vm202, 1, 0
    %275 = vset.pattern.permute.xlu0 0
    %276 = vperm.xlu0 %275, %v274
    %v277 = vpop.permute.xlu0 %276
    %vm278 = vcmp.eq.s32.totalorder %v277, 1
    %vm279 = vmand %vm243, %vm278
    %vm280 = vmor %vm273, %vm279
    %v281 = vsel %vm231, %v148, %v145
    %v282 = vsel %vm232, %v189, %v186
    %v283 = vsel %vm204, 1, 0
    %284 = vset.pattern.permute.xlu0 0
    %285 = vperm.xlu0 %284, %v283
    %v286 = vpop.permute.xlu0 %285
    %vm287 = vcmp.eq.s32.totalorder %v286, 1
    %vm288 = vmand %vm231, %vm287
    %v289 = vsel %vm203, 1, 0
    %290 = vset.pattern.permute.xlu0 0
    %291 = vperm.xlu0 %290, %v289
    %v292 = vpop.permute.xlu0 %291
    %vm293 = vcmp.eq.s32.totalorder %v292, 1
    %vm294 = vmand %vm243, %vm293
    %vm295 = vmor %vm288, %vm294
    %v296 = vsel %vm231, %v145, %v148
    %v297 = vsel %vm232, %v186, %v189
    %vm298 = vmand %vm231, %vm293
    %vm299 = vmand %vm243, %vm287
    %vm300 = vmor %vm298, %vm299
    %v301 = vsel %vm231, %v142, %v151
    %v302 = vsel %vm232, %v183, %v192
    %vm303 = vmand %vm231, %vm278
    %vm304 = vmand %vm243, %vm272
    %vm305 = vmor %vm303, %vm304
    %v306 = vsel %vm231, %v139, %v154
    %v307 = vsel %vm232, %v180, %v195
    %vm308 = vmand %vm231, %vm263
    %vm309 = vmand %vm243, %vm257
    %vm310 = vmor %vm308, %vm309
    %v311 = vsel %vm231, %v136, %v157
    %v312 = vsel %vm232, %v177, %v198
    %vm313 = vmand %vm231, %vm248
    %vm314 = vmand %vm243, %vm239
    %vm315 = vmor %vm313, %vm314
    %vm316 = vcmask 523264
    %v318 = vsel %vm316, 0.0, 0
    %320 = vmatpush.msra.mxu0 0.0
    %321 = vmatpush.msra.mxu0 0.0
    %322 = vmatpush.msra.mxu0 0.0
    %323 = vmatpush.msra.mxu0 0.0
    %324 = vmatpush.msra.mxu0 0.0
    %325 = vmatpush.msra.mxu0 0.0
    %326 = vmatpush.msra.mxu0 0.0
    %327 = vmatpush.msra.mxu0 0.0
    %328 = vmatpush.msra.mxu0 %v227
    %329 = vmatpush.msra.mxu0 %v225
    %330 = vmatpush.msra.mxu0 %v223
    %331 = vmatpush.msra.mxu0 %v221
    %332 = vmatpush.msra.mxu0 %v219
    %333 = vmatpush.msra.mxu0 %v217
    %334 = vmatpush.msra.mxu0 %v215
    %335 = vmatpush.msra.mxu0 %v213
    %336 = vmatmul.f32.gmra.mxu0 %v318
    %v337 = vpop.f32.mrf.mxu0
    %v338 = vadd.f32 0.0, %v337
    %339 = vdwg.mxu0
    %340 = vmatpush.msra.mxu0 0.0
    %341 = vmatpush.msra.mxu0 0.0
    %342 = vmatpush.msra.mxu0 0.0
    %343 = vmatpush.msra.mxu0 0.0
    %344 = vmatpush.msra.mxu0 0.0
    %345 = vmatpush.msra.mxu0 0.0
    %346 = vmatpush.msra.mxu0 0.0
    %347 = vmatpush.msra.mxu0 0.0
    %348 = vmatpush.msra.mxu0 %v228
    %349 = vmatpush.msra.mxu0 %v226
    %350 = vmatpush.msra.mxu0 %v224
    %351 = vmatpush.msra.mxu0 %v222
    %352 = vmatpush.msra.mxu0 %v220
    %353 = vmatpush.msra.mxu0 %v218
    %354 = vmatpush.msra.mxu0 %v216
    %355 = vmatpush.msra.mxu0 %v214
    %356 = vmatmul.f32.gmra.mxu0 %v318
    %v357 = vpop.f32.mrf.mxu0
    %v358 = vadd.f32 0.0, %v357
    %359 = vdwg.mxu0
    %v360 = vadd.f32 %v233, %v338
    %v361 = vadd.f32 %v234, %v358
    %v362 = vxor.u32 %v360, 2147483648
    %v363 = vxor.u32 %v361, 2147483648
    %v364 = vmul.f32 %v362, 1.442695
    %v365 = vpow.pop %v364
    %v366 = vmul.f32 %v363, 1.442695
    %v367 = vpow.pop %v366
    %v368 = vadd.f32 %v365, 1.0
    %v369 = vadd.f32 %v367, 1.0
    %v370 = vrcp.pop %v368
    %v371 = vmul.f32 %v368, %v370
    %v372 = vsub.f32 1.0, %v371
    %v373 = vmul.f32 %v370, %v372
    %v374 = vadd.f32 %v370, %v373
    %vm375 = vweird.f32 %v368
    %vm376 = vweird.f32 %v370
    %vm377 = vmor %vm375, %vm376
    %v378 = vsel %vm377, %v370, %v374
    %v379 = vand.u32 2147483647, %v368
    %vm380 = vcmp.eq.f32.partialorder %v379, 8.507059e+37
    %v381 = vand.u32 %v368, 2147483648
    %v382 = vor.u32 1.1754944e-38, %v381
    %v383 = vsel %vm380, %v382, %v378
    %v384 = vmul.f32 1.0, %v383
    %v385 = vrcp.pop %v369
    %v386 = vmul.f32 %v369, %v385
    %v387 = vsub.f32 1.0, %v386
    %v388 = vmul.f32 %v385, %v387
    %v389 = vadd.f32 %v385, %v388
    %vm390 = vweird.f32 %v369
    %vm391 = vweird.f32 %v385
    %vm392 = vmor %vm390, %vm391
    %v393 = vsel %vm392, %v385, %v389
    %v394 = vand.u32 2147483647, %v369
    %vm395 = vcmp.eq.f32.partialorder %v394, 8.507059e+37
    %v396 = vand.u32 %v369, 2147483648
    %v397 = vor.u32 1.1754944e-38, %v396
    %v398 = vsel %vm395, %v397, %v393
    %v399 = vmul.f32 1.0, %v398
    %v400 = vmul.f32 %v399, 2.0
    %v401 = vsub.f32 %v400, 1.0
    %v402 = vmul.f32 %v384, 0.0
    %v403 = vmul.f32 %v384, %v401
    %405 = vrot.lane.b32.xlu0 %v403, 64
    %v406 = vpop.permute.xlu0 %405
    %v408 = vadd.f32 %v402, %v406
    %v409 = vtanh.pop %v408
    %v410 = vmul.f32 %v399, %v409
    %412 = vrot.lane.b32.xlu0 %v408, 64
    %v413 = vpop.permute.xlu0 %412
    %v415 = vsel %vm250, %v413, 0.0
    %417 = vrot.lane.b32.xlu0 %v410, 64
    %v418 = vpop.permute.xlu0 %417
    %v420 = vsel %vm250, %v418, 0.0
    %v422 = vsel %vm316, %v420, 0
    %424 = vmatpush.msra.mxu0 0.0
    %425 = vmatpush.msra.mxu0 0.0
    %426 = vmatpush.msra.mxu0 0.0
    %427 = vmatpush.msra.mxu0 0.0
    %428 = vmatpush.msra.mxu0 0.0
    %429 = vmatpush.msra.mxu0 0.0
    %430 = vmatpush.msra.mxu0 0.0
    %431 = vmatpush.msra.mxu0 0.0
    %432 = vmatpush.msra.mxu0 %v227
    %433 = vmatpush.msra.mxu0 %v225
    %434 = vmatpush.msra.mxu0 %v223
    %435 = vmatpush.msra.mxu0 %v221
    %436 = vmatpush.msra.mxu0 %v219
    %437 = vmatpush.msra.mxu0 %v217
    %438 = vmatpush.msra.mxu0 %v215
    %439 = vmatpush.msra.mxu0 %v213
    %440 = vmatmul.f32.gmra.mxu0 %v422
    %v441 = vpop.f32.mrf.mxu0
    %v442 = vadd.f32 0.0, %v441
    %443 = vdwg.mxu0
    %444 = vmatpush.msra.mxu0 0.0
    %445 = vmatpush.msra.mxu0 0.0
    %446 = vmatpush.msra.mxu0 0.0
    %447 = vmatpush.msra.mxu0 0.0
    %448 = vmatpush.msra.mxu0 0.0
    %449 = vmatpush.msra.mxu0 0.0
    %450 = vmatpush.msra.mxu0 0.0
    %451 = vmatpush.msra.mxu0 0.0
    %452 = vmatpush.msra.mxu0 %v228
    %453 = vmatpush.msra.mxu0 %v226
    %454 = vmatpush.msra.mxu0 %v224
    %455 = vmatpush.msra.mxu0 %v222
    %456 = vmatpush.msra.mxu0 %v220
    %457 = vmatpush.msra.mxu0 %v218
    %458 = vmatpush.msra.mxu0 %v216
    %459 = vmatpush.msra.mxu0 %v214
    %460 = vmatmul.f32.gmra.mxu0 %v422
    %v461 = vpop.f32.mrf.mxu0
    %v462 = vadd.f32 0.0, %v461
    %463 = vdwg.mxu0
    %v464 = vadd.f32 %v251, %v442
    %v465 = vadd.f32 %v252, %v462
    %v466 = vxor.u32 %v464, 2147483648
    %v467 = vxor.u32 %v465, 2147483648
    %v468 = vmul.f32 %v466, 1.442695
    %v469 = vpow.pop %v468
    %v470 = vmul.f32 %v467, 1.442695
    %v471 = vpow.pop %v470
    %v472 = vadd.f32 %v469, 1.0
    %v473 = vadd.f32 %v471, 1.0
    %v474 = vrcp.pop %v472
    %v475 = vmul.f32 %v472, %v474
    %v476 = vsub.f32 1.0, %v475
    %v477 = vmul.f32 %v474, %v476
    %v478 = vadd.f32 %v474, %v477
    %vm479 = vweird.f32 %v472
    %vm480 = vweird.f32 %v474
    %vm481 = vmor %vm479, %vm480
    %v482 = vsel %vm481, %v474, %v478
    %v483 = vand.u32 2147483647, %v472
    %vm484 = vcmp.eq.f32.partialorder %v483, 8.507059e+37
    %v485 = vand.u32 %v472, 2147483648
    %v486 = vor.u32 1.1754944e-38, %v485
    %v487 = vsel %vm484, %v486, %v482
    %v488 = vmul.f32 1.0, %v487
    %v489 = vrcp.pop %v473
    %v490 = vmul.f32 %v473, %v489
    %v491 = vsub.f32 1.0, %v490
    %v492 = vmul.f32 %v489, %v491
    %v493 = vadd.f32 %v489, %v492
    %vm494 = vweird.f32 %v473
    %vm495 = vweird.f32 %v489
    %vm496 = vmor %vm494, %vm495
    %v497 = vsel %vm496, %v489, %v493
    %v498 = vand.u32 2147483647, %v473
    %vm499 = vcmp.eq.f32.partialorder %v498, 8.507059e+37
    %v500 = vand.u32 %v473, 2147483648
    %v501 = vor.u32 1.1754944e-38, %v500
    %v502 = vsel %vm499, %v501, %v497
    %v503 = vmul.f32 1.0, %v502
    %v504 = vmul.f32 %v503, 2.0
    %v505 = vsub.f32 %v504, 1.0
    %507 = vrot.lane.b32.xlu0 %v415, 64
    %v508 = vpop.permute.xlu0 %507
    %v510 = vmul.f32 %v488, %v508
    %v511 = vmul.f32 %v488, %v505
    %513 = vrot.lane.b32.xlu0 %v511, 64
    %v514 = vpop.permute.xlu0 %513
    %v516 = vadd.f32 %v510, %v514
    %v517 = vtanh.pop %v516
    %v518 = vmul.f32 %v503, %v517
    %520 = vrot.lane.b32.xlu0 %v516, 64
    %v521 = vpop.permute.xlu0 %520
    %v523 = vsel %vm265, %v521, %v415
    %525 = vrot.lane.b32.xlu0 %v518, 64
    %v526 = vpop.permute.xlu0 %525
    %v528 = vsel %vm265, %v526, %v420
    %v530 = vsel %vm316, %v528, 0
    %532 = vmatpush.msra.mxu0 0.0
    %533 = vmatpush.msra.mxu0 0.0
    %534 = vmatpush.msra.mxu0 0.0
    %535 = vmatpush.msra.mxu0 0.0
    %536 = vmatpush.msra.mxu0 0.0
    %537 = vmatpush.msra.mxu0 0.0
    %538 = vmatpush.msra.mxu0 0.0
    %539 = vmatpush.msra.mxu0 0.0
    %540 = vmatpush.msra.mxu0 %v227
    %541 = vmatpush.msra.mxu0 %v225
    %542 = vmatpush.msra.mxu0 %v223
    %543 = vmatpush.msra.mxu0 %v221
    %544 = vmatpush.msra.mxu0 %v219
    %545 = vmatpush.msra.mxu0 %v217
    %546 = vmatpush.msra.mxu0 %v215
    %547 = vmatpush.msra.mxu0 %v213
    %548 = vmatmul.f32.gmra.mxu0 %v530
    %v549 = vpop.f32.mrf.mxu0
    %v550 = vadd.f32 0.0, %v549
    %551 = vdwg.mxu0
    %552 = vmatpush.msra.mxu0 0.0
    %553 = vmatpush.msra.mxu0 0.0
    %554 = vmatpush.msra.mxu0 0.0
    %555 = vmatpush.msra.mxu0 0.0
    %556 = vmatpush.msra.mxu0 0.0
    %557 = vmatpush.msra.mxu0 0.0
    %558 = vmatpush.msra.mxu0 0.0
    %559 = vmatpush.msra.mxu0 0.0
    %560 = vmatpush.msra.mxu0 %v228
    %561 = vmatpush.msra.mxu0 %v226
    %562 = vmatpush.msra.mxu0 %v224
    %563 = vmatpush.msra.mxu0 %v222
    %564 = vmatpush.msra.mxu0 %v220
    %565 = vmatpush.msra.mxu0 %v218
    %566 = vmatpush.msra.mxu0 %v216
    %567 = vmatpush.msra.mxu0 %v214
    %568 = vmatmul.f32.gmra.mxu0 %v530
    %v569 = vpop.f32.mrf.mxu0
    %v570 = vadd.f32 0.0, %v569
    %571 = vdwg.mxu0
    %v572 = vadd.f32 %v266, %v550
    %v573 = vadd.f32 %v267, %v570
    %v574 = vxor.u32 %v572, 2147483648
    %v575 = vxor.u32 %v573, 2147483648
    %v576 = vmul.f32 %v574, 1.442695
    %v577 = vpow.pop %v576
    %v578 = vmul.f32 %v575, 1.442695
    %v579 = vpow.pop %v578
    %v580 = vadd.f32 %v577, 1.0
    %v581 = vadd.f32 %v579, 1.0
    %v582 = vrcp.pop %v580
    %v583 = vmul.f32 %v580, %v582
    %v584 = vsub.f32 1.0, %v583
    %v585 = vmul.f32 %v582, %v584
    %v586 = vadd.f32 %v582, %v585
    %vm587 = vweird.f32 %v580
    %vm588 = vweird.f32 %v582
    %vm589 = vmor %vm587, %vm588
    %v590 = vsel %vm589, %v582, %v586
    %v591 = vand.u32 2147483647, %v580
    %vm592 = vcmp.eq.f32.partialorder %v591, 8.507059e+37
    %v593 = vand.u32 %v580, 2147483648
    %v594 = vor.u32 1.1754944e-38, %v593
    %v595 = vsel %vm592, %v594, %v590
    %v596 = vmul.f32 1.0, %v595
    %v597 = vrcp.pop %v581
    %v598 = vmul.f32 %v581, %v597
    %v599 = vsub.f32 1.0, %v598
    %v600 = vmul.f32 %v597, %v599
    %v601 = vadd.f32 %v597, %v600
    %vm602 = vweird.f32 %v581
    %vm603 = vweird.f32 %v597
    %vm604 = vmor %vm602, %vm603
    %v605 = vsel %vm604, %v597, %v601
    %v606 = vand.u32 2147483647, %v581
    %vm607 = vcmp.eq.f32.partialorder %v606, 8.507059e+37
    %v608 = vand.u32 %v581, 2147483648
    %v609 = vor.u32 1.1754944e-38, %v608
    %v610 = vsel %vm607, %v609, %v605
    %v611 = vmul.f32 1.0, %v610
    %v612 = vmul.f32 %v611, 2.0
    %v613 = vsub.f32 %v612, 1.0
    %615 = vrot.lane.b32.xlu0 %v523, 64
    %v616 = vpop.permute.xlu0 %615
    %v618 = vmul.f32 %v596, %v616
    %v619 = vmul.f32 %v596, %v613
    %621 = vrot.lane.b32.xlu0 %v619, 64
    %v622 = vpop.permute.xlu0 %621
    %v624 = vadd.f32 %v618, %v622
    %v625 = vtanh.pop %v624
    %v626 = vmul.f32 %v611, %v625
    %628 = vrot.lane.b32.xlu0 %v624, 64
    %v629 = vpop.permute.xlu0 %628
    %v631 = vsel %vm280, %v629, %v523
    %633 = vrot.lane.b32.xlu0 %v626, 64
    %v634 = vpop.permute.xlu0 %633
    %v636 = vsel %vm280, %v634, %v528
    %v638 = vsel %vm316, %v636, 0
    %640 = vmatpush.msra.mxu0 0.0
    %641 = vmatpush.msra.mxu0 0.0
    %642 = vmatpush.msra.mxu0 0.0
    %643 = vmatpush.msra.mxu0 0.0
    %644 = vmatpush.msra.mxu0 0.0
    %645 = vmatpush.msra.mxu0 0.0
    %646 = vmatpush.msra.mxu0 0.0
    %647 = vmatpush.msra.mxu0 0.0
    %648 = vmatpush.msra.mxu0 %v227
    %649 = vmatpush.msra.mxu0 %v225
    %650 = vmatpush.msra.mxu0 %v223
    %651 = vmatpush.msra.mxu0 %v221
    %652 = vmatpush.msra.mxu0 %v219
    %653 = vmatpush.msra.mxu0 %v217
    %654 = vmatpush.msra.mxu0 %v215
    %655 = vmatpush.msra.mxu0 %v213
    %656 = vmatmul.f32.gmra.mxu0 %v638
    %v657 = vpop.f32.mrf.mxu0
    %v658 = vadd.f32 0.0, %v657
    %659 = vdwg.mxu0
    %660 = vmatpush.msra.mxu0 0.0
    %661 = vmatpush.msra.mxu0 0.0
    %662 = vmatpush.msra.mxu0 0.0
    %663 = vmatpush.msra.mxu0 0.0
    %664 = vmatpush.msra.mxu0 0.0
    %665 = vmatpush.msra.mxu0 0.0
    %666 = vmatpush.msra.mxu0 0.0
    %667 = vmatpush.msra.mxu0 0.0
    %668 = vmatpush.msra.mxu0 %v228
    %669 = vmatpush.msra.mxu0 %v226
    %670 = vmatpush.msra.mxu0 %v224
    %671 = vmatpush.msra.mxu0 %v222
    %672 = vmatpush.msra.mxu0 %v220
    %673 = vmatpush.msra.mxu0 %v218
    %674 = vmatpush.msra.mxu0 %v216
    %675 = vmatpush.msra.mxu0 %v214
    %676 = vmatmul.f32.gmra.mxu0 %v638
    %v677 = vpop.f32.mrf.mxu0
    %v678 = vadd.f32 0.0, %v677
    %679 = vdwg.mxu0
    %v680 = vadd.f32 %v281, %v658
    %v681 = vadd.f32 %v282, %v678
    %v682 = vxor.u32 %v680, 2147483648
    %v683 = vxor.u32 %v681, 2147483648
    %v684 = vmul.f32 %v682, 1.442695
    %v685 = vpow.pop %v684
    %v686 = vmul.f32 %v683, 1.442695
    %v687 = vpow.pop %v686
    %v688 = vadd.f32 %v685, 1.0
    %v689 = vadd.f32 %v687, 1.0
    %v690 = vrcp.pop %v688
    %v691 = vmul.f32 %v688, %v690
    %v692 = vsub.f32 1.0, %v691
    %v693 = vmul.f32 %v690, %v692
    %v694 = vadd.f32 %v690, %v693
    %vm695 = vweird.f32 %v688
    %vm696 = vweird.f32 %v690
    %vm697 = vmor %vm695, %vm696
    %v698 = vsel %vm697, %v690, %v694
    %v699 = vand.u32 2147483647, %v688
    %vm700 = vcmp.eq.f32.partialorder %v699, 8.507059e+37
    %v701 = vand.u32 %v688, 2147483648
    %v702 = vor.u32 1.1754944e-38, %v701
    %v703 = vsel %vm700, %v702, %v698
    %v704 = vmul.f32 1.0, %v703
    %v705 = vrcp.pop %v689
    %v706 = vmul.f32 %v689, %v705
    %v707 = vsub.f32 1.0, %v706
    %v708 = vmul.f32 %v705, %v707
    %v709 = vadd.f32 %v705, %v708
    %vm710 = vweird.f32 %v689
    %vm711 = vweird.f32 %v705
    %vm712 = vmor %vm710, %vm711
    %v713 = vsel %vm712, %v705, %v709
    %v714 = vand.u32 2147483647, %v689
    %vm715 = vcmp.eq.f32.partialorder %v714, 8.507059e+37
    %v716 = vand.u32 %v689, 2147483648
    %v717 = vor.u32 1.1754944e-38, %v716
    %v718 = vsel %vm715, %v717, %v713
    %v719 = vmul.f32 1.0, %v718
    %v720 = vmul.f32 %v719, 2.0
    %v721 = vsub.f32 %v720, 1.0
    %723 = vrot.lane.b32.xlu0 %v631, 64
    %v724 = vpop.permute.xlu0 %723
    %v726 = vmul.f32 %v704, %v724
    %v727 = vmul.f32 %v704, %v721
    %729 = vrot.lane.b32.xlu0 %v727, 64
    %v730 = vpop.permute.xlu0 %729
    %v732 = vadd.f32 %v726, %v730
    %v733 = vtanh.pop %v732
    %v734 = vmul.f32 %v719, %v733
    %736 = vrot.lane.b32.xlu0 %v732, 64
    %v737 = vpop.permute.xlu0 %736
    %v739 = vsel %vm295, %v737, %v631
    %741 = vrot.lane.b32.xlu0 %v734, 64
    %v742 = vpop.permute.xlu0 %741
    %v744 = vsel %vm295, %v742, %v636
    %v746 = vsel %vm316, %v744, 0
    %748 = vmatpush.msra.mxu0 0.0
    %749 = vmatpush.msra.mxu0 0.0
    %750 = vmatpush.msra.mxu0 0.0
    %751 = vmatpush.msra.mxu0 0.0
    %752 = vmatpush.msra.mxu0 0.0
    %753 = vmatpush.msra.mxu0 0.0
    %754 = vmatpush.msra.mxu0 0.0
    %755 = vmatpush.msra.mxu0 0.0
    %756 = vmatpush.msra.mxu0 %v227
    %757 = vmatpush.msra.mxu0 %v225
    %758 = vmatpush.msra.mxu0 %v223
    %759 = vmatpush.msra.mxu0 %v221
    %760 = vmatpush.msra.mxu0 %v219
    %761 = vmatpush.msra.mxu0 %v217
    %762 = vmatpush.msra.mxu0 %v215
    %763 = vmatpush.msra.mxu0 %v213
    %764 = vmatmul.f32.gmra.mxu0 %v746
    %v765 = vpop.f32.mrf.mxu0
    %v766 = vadd.f32 0.0, %v765
    %767 = vdwg.mxu0
    %768 = vmatpush.msra.mxu0 0.0
    %769 = vmatpush.msra.mxu0 0.0
    %770 = vmatpush.msra.mxu0 0.0
    %771 = vmatpush.msra.mxu0 0.0
    %772 = vmatpush.msra.mxu0 0.0
    %773 = vmatpush.msra.mxu0 0.0
    %774 = vmatpush.msra.mxu0 0.0
    %775 = vmatpush.msra.mxu0 0.0
    %776 = vmatpush.msra.mxu0 %v228
    %777 = vmatpush.msra.mxu0 %v226
    %778 = vmatpush.msra.mxu0 %v224
    %779 = vmatpush.msra.mxu0 %v222
    %780 = vmatpush.msra.mxu0 %v220
    %781 = vmatpush.msra.mxu0 %v218
    %782 = vmatpush.msra.mxu0 %v216
    %783 = vmatpush.msra.mxu0 %v214
    %784 = vmatmul.f32.gmra.mxu0 %v746
    %v785 = vpop.f32.mrf.mxu0
    %v786 = vadd.f32 0.0, %v785
    %787 = vdwg.mxu0
    %v788 = vadd.f32 %v296, %v766
    %v789 = vadd.f32 %v297, %v786
    %v790 = vxor.u32 %v788, 2147483648
    %v791 = vxor.u32 %v789, 2147483648
    %v792 = vmul.f32 %v790, 1.442695
    %v793 = vpow.pop %v792
    %v794 = vmul.f32 %v791, 1.442695
    %v795 = vpow.pop %v794
    %v796 = vadd.f32 %v793, 1.0
    %v797 = vadd.f32 %v795, 1.0
    %v798 = vrcp.pop %v796
    %v799 = vmul.f32 %v796, %v798
    %v800 = vsub.f32 1.0, %v799
    %v801 = vmul.f32 %v798, %v800
    %v802 = vadd.f32 %v798, %v801
    %vm803 = vweird.f32 %v796
    %vm804 = vweird.f32 %v798
    %vm805 = vmor %vm803, %vm804
    %v806 = vsel %vm805, %v798, %v802
    %v807 = vand.u32 2147483647, %v796
    %vm808 = vcmp.eq.f32.partialorder %v807, 8.507059e+37
    %v809 = vand.u32 %v796, 2147483648
    %v810 = vor.u32 1.1754944e-38, %v809
    %v811 = vsel %vm808, %v810, %v806
    %v812 = vmul.f32 1.0, %v811
    %v813 = vrcp.pop %v797
    %v814 = vmul.f32 %v797, %v813
    %v815 = vsub.f32 1.0, %v814
    %v816 = vmul.f32 %v813, %v815
    %v817 = vadd.f32 %v813, %v816
    %vm818 = vweird.f32 %v797
    %vm819 = vweird.f32 %v813
    %vm820 = vmor %vm818, %vm819
    %v821 = vsel %vm820, %v813, %v817
    %v822 = vand.u32 2147483647, %v797
    %vm823 = vcmp.eq.f32.partialorder %v822, 8.507059e+37
    %v824 = vand.u32 %v797, 2147483648
    %v825 = vor.u32 1.1754944e-38, %v824
    %v826 = vsel %vm823, %v825, %v821
    %v827 = vmul.f32 1.0, %v826
    %v828 = vmul.f32 %v827, 2.0
    %v829 = vsub.f32 %v828, 1.0
    %831 = vrot.lane.b32.xlu0 %v739, 64
    %v832 = vpop.permute.xlu0 %831
    %v834 = vmul.f32 %v812, %v832
    %v835 = vmul.f32 %v812, %v829
    %837 = vrot.lane.b32.xlu0 %v835, 64
    %v838 = vpop.permute.xlu0 %837
    %v840 = vadd.f32 %v834, %v838
    %v841 = vtanh.pop %v840
    %v842 = vmul.f32 %v827, %v841
    %844 = vrot.lane.b32.xlu0 %v840, 64
    %v845 = vpop.permute.xlu0 %844
    %v847 = vsel %vm300, %v845, %v739
    %849 = vrot.lane.b32.xlu0 %v842, 64
    %v850 = vpop.permute.xlu0 %849
    %v852 = vsel %vm300, %v850, %v744
    %v854 = vsel %vm316, %v852, 0
    %856 = vmatpush.msra.mxu0 0.0
    %857 = vmatpush.msra.mxu0 0.0
    %858 = vmatpush.msra.mxu0 0.0
    %859 = vmatpush.msra.mxu0 0.0
    %860 = vmatpush.msra.mxu0 0.0
    %861 = vmatpush.msra.mxu0 0.0
    %862 = vmatpush.msra.mxu0 0.0
    %863 = vmatpush.msra.mxu0 0.0
    %864 = vmatpush.msra.mxu0 %v227
    %865 = vmatpush.msra.mxu0 %v225
    %866 = vmatpush.msra.mxu0 %v223
    %867 = vmatpush.msra.mxu0 %v221
    %868 = vmatpush.msra.mxu0 %v219
    %869 = vmatpush.msra.mxu0 %v217
    %870 = vmatpush.msra.mxu0 %v215
    %871 = vmatpush.msra.mxu0 %v213
    %872 = vmatmul.f32.gmra.mxu0 %v854
    %v873 = vpop.f32.mrf.mxu0
    %v874 = vadd.f32 0.0, %v873
    %875 = vdwg.mxu0
    %876 = vmatpush.msra.mxu0 0.0
    %877 = vmatpush.msra.mxu0 0.0
    %878 = vmatpush.msra.mxu0 0.0
    %879 = vmatpush.msra.mxu0 0.0
    %880 = vmatpush.msra.mxu0 0.0
    %881 = vmatpush.msra.mxu0 0.0
    %882 = vmatpush.msra.mxu0 0.0
    %883 = vmatpush.msra.mxu0 0.0
    %884 = vmatpush.msra.mxu0 %v228
    %885 = vmatpush.msra.mxu0 %v226
    %886 = vmatpush.msra.mxu0 %v224
    %887 = vmatpush.msra.mxu0 %v222
    %888 = vmatpush.msra.mxu0 %v220
    %889 = vmatpush.msra.mxu0 %v218
    %890 = vmatpush.msra.mxu0 %v216
    %891 = vmatpush.msra.mxu0 %v214
    %892 = vmatmul.f32.gmra.mxu0 %v854
    %v893 = vpop.f32.mrf.mxu0
    %v894 = vadd.f32 0.0, %v893
    %895 = vdwg.mxu0
    %v896 = vadd.f32 %v301, %v874
    %v897 = vadd.f32 %v302, %v894
    %v898 = vxor.u32 %v896, 2147483648
    %v899 = vxor.u32 %v897, 2147483648
    %v900 = vmul.f32 %v898, 1.442695
    %v901 = vpow.pop %v900
    %v902 = vmul.f32 %v899, 1.442695
    %v903 = vpow.pop %v902
    %v904 = vadd.f32 %v901, 1.0
    %v905 = vadd.f32 %v903, 1.0
    %v906 = vrcp.pop %v904
    %v907 = vmul.f32 %v904, %v906
    %v908 = vsub.f32 1.0, %v907
    %v909 = vmul.f32 %v906, %v908
    %v910 = vadd.f32 %v906, %v909
    %vm911 = vweird.f32 %v904
    %vm912 = vweird.f32 %v906
    %vm913 = vmor %vm911, %vm912
    %v914 = vsel %vm913, %v906, %v910
    %v915 = vand.u32 2147483647, %v904
    %vm916 = vcmp.eq.f32.partialorder %v915, 8.507059e+37
    %v917 = vand.u32 %v904, 2147483648
    %v918 = vor.u32 1.1754944e-38, %v917
    %v919 = vsel %vm916, %v918, %v914
    %v920 = vmul.f32 1.0, %v919
    %v921 = vrcp.pop %v905
    %v922 = vmul.f32 %v905, %v921
    %v923 = vsub.f32 1.0, %v922
    %v924 = vmul.f32 %v921, %v923
    %v925 = vadd.f32 %v921, %v924
    %vm926 = vweird.f32 %v905
    %vm927 = vweird.f32 %v921
    %vm928 = vmor %vm926, %vm927
    %v929 = vsel %vm928, %v921, %v925
    %v930 = vand.u32 2147483647, %v905
    %vm931 = vcmp.eq.f32.partialorder %v930, 8.507059e+37
    %v932 = vand.u32 %v905, 2147483648
    %v933 = vor.u32 1.1754944e-38, %v932
    %v934 = vsel %vm931, %v933, %v929
    %v935 = vmul.f32 1.0, %v934
    %v936 = vmul.f32 %v935, 2.0
    %v937 = vsub.f32 %v936, 1.0
    %939 = vrot.lane.b32.xlu0 %v847, 64
    %v940 = vpop.permute.xlu0 %939
    %v942 = vmul.f32 %v920, %v940
    %v943 = vmul.f32 %v920, %v937
    %945 = vrot.lane.b32.xlu0 %v943, 64
    %v946 = vpop.permute.xlu0 %945
    %v948 = vadd.f32 %v942, %v946
    %v949 = vtanh.pop %v948
    %v950 = vmul.f32 %v935, %v949
    %952 = vrot.lane.b32.xlu0 %v948, 64
    %v953 = vpop.permute.xlu0 %952
    %v955 = vsel %vm305, %v953, %v847
    %957 = vrot.lane.b32.xlu0 %v950, 64
    %v958 = vpop.permute.xlu0 %957
    %v960 = vsel %vm305, %v958, %v852
    %v962 = vsel %vm316, %v960, 0
    %964 = vmatpush.msra.mxu0 0.0
    %965 = vmatpush.msra.mxu0 0.0
    %966 = vmatpush.msra.mxu0 0.0
    %967 = vmatpush.msra.mxu0 0.0
    %968 = vmatpush.msra.mxu0 0.0
    %969 = vmatpush.msra.mxu0 0.0
    %970 = vmatpush.msra.mxu0 0.0
    %971 = vmatpush.msra.mxu0 0.0
    %972 = vmatpush.msra.mxu0 %v227
    %973 = vmatpush.msra.mxu0 %v225
    %974 = vmatpush.msra.mxu0 %v223
    %975 = vmatpush.msra.mxu0 %v221
    %976 = vmatpush.msra.mxu0 %v219
    %977 = vmatpush.msra.mxu0 %v217
    %978 = vmatpush.msra.mxu0 %v215
    %979 = vmatpush.msra.mxu0 %v213
    %980 = vmatmul.f32.gmra.mxu0 %v962
    %v981 = vpop.f32.mrf.mxu0
    %v982 = vadd.f32 0.0, %v981
    %983 = vdwg.mxu0
    %984 = vmatpush.msra.mxu0 0.0
    %985 = vmatpush.msra.mxu0 0.0
    %986 = vmatpush.msra.mxu0 0.0
    %987 = vmatpush.msra.mxu0 0.0
    %988 = vmatpush.msra.mxu0 0.0
    %989 = vmatpush.msra.mxu0 0.0
    %990 = vmatpush.msra.mxu0 0.0
    %991 = vmatpush.msra.mxu0 0.0
    %992 = vmatpush.msra.mxu0 %v228
    %993 = vmatpush.msra.mxu0 %v226
    %994 = vmatpush.msra.mxu0 %v224
    %995 = vmatpush.msra.mxu0 %v222
    %996 = vmatpush.msra.mxu0 %v220
    %997 = vmatpush.msra.mxu0 %v218
    %998 = vmatpush.msra.mxu0 %v216
    %999 = vmatpush.msra.mxu0 %v214
    %1000 = vmatmul.f32.gmra.mxu0 %v962
    %v1001 = vpop.f32.mrf.mxu0
    %v1002 = vadd.f32 0.0, %v1001
    %1003 = vdwg.mxu0
    %v1004 = vadd.f32 %v306, %v982
    %v1005 = vadd.f32 %v307, %v1002
    %v1006 = vxor.u32 %v1004, 2147483648
    %v1007 = vxor.u32 %v1005, 2147483648
    %v1008 = vmul.f32 %v1006, 1.442695
    %v1009 = vpow.pop %v1008
    %v1010 = vmul.f32 %v1007, 1.442695
    %v1011 = vpow.pop %v1010
    %v1012 = vadd.f32 %v1009, 1.0
    %v1013 = vadd.f32 %v1011, 1.0
    %v1014 = vrcp.pop %v1012
    %v1015 = vmul.f32 %v1012, %v1014
    %v1016 = vsub.f32 1.0, %v1015
    %v1017 = vmul.f32 %v1014, %v1016
    %v1018 = vadd.f32 %v1014, %v1017
    %vm1019 = vweird.f32 %v1012
    %vm1020 = vweird.f32 %v1014
    %vm1021 = vmor %vm1019, %vm1020
    %v1022 = vsel %vm1021, %v1014, %v1018
    %v1023 = vand.u32 2147483647, %v1012
    %vm1024 = vcmp.eq.f32.partialorder %v1023, 8.507059e+37
    %v1025 = vand.u32 %v1012, 2147483648
    %v1026 = vor.u32 1.1754944e-38, %v1025
    %v1027 = vsel %vm1024, %v1026, %v1022
    %v1028 = vmul.f32 1.0, %v1027
    %v1029 = vrcp.pop %v1013
    %v1030 = vmul.f32 %v1013, %v1029
    %v1031 = vsub.f32 1.0, %v1030
    %v1032 = vmul.f32 %v1029, %v1031
    %v1033 = vadd.f32 %v1029, %v1032
    %vm1034 = vweird.f32 %v1013
    %vm1035 = vweird.f32 %v1029
    %vm1036 = vmor %vm1034, %vm1035
    %v1037 = vsel %vm1036, %v1029, %v1033
    %v1038 = vand.u32 2147483647, %v1013
    %vm1039 = vcmp.eq.f32.partialorder %v1038, 8.507059e+37
    %v1040 = vand.u32 %v1013, 2147483648
    %v1041 = vor.u32 1.1754944e-38, %v1040
    %v1042 = vsel %vm1039, %v1041, %v1037
    %v1043 = vmul.f32 1.0, %v1042
    %v1044 = vmul.f32 %v1043, 2.0
    %v1045 = vsub.f32 %v1044, 1.0
    %1047 = vrot.lane.b32.xlu0 %v955, 64
    %v1048 = vpop.permute.xlu0 %1047
    %v1050 = vmul.f32 %v1028, %v1048
    %v1051 = vmul.f32 %v1028, %v1045
    %1053 = vrot.lane.b32.xlu0 %v1051, 64
    %v1054 = vpop.permute.xlu0 %1053
    %v1056 = vadd.f32 %v1050, %v1054
    %v1057 = vtanh.pop %v1056
    %v1058 = vmul.f32 %v1043, %v1057
    %1060 = vrot.lane.b32.xlu0 %v1056, 64
    %v1061 = vpop.permute.xlu0 %1060
    %v1063 = vsel %vm310, %v1061, %v955
    %1065 = vrot.lane.b32.xlu0 %v1058, 64
    %v1066 = vpop.permute.xlu0 %1065
    %v1068 = vsel %vm310, %v1066, %v960
    %v1070 = vsel %vm316, %v1068, 0
    %1072 = vmatpush.msra.mxu0 0.0
    %1073 = vmatpush.msra.mxu0 0.0
    %1074 = vmatpush.msra.mxu0 0.0
    %1075 = vmatpush.msra.mxu0 0.0
    %1076 = vmatpush.msra.mxu0 0.0
    %1077 = vmatpush.msra.mxu0 0.0
    %1078 = vmatpush.msra.mxu0 0.0
    %1079 = vmatpush.msra.mxu0 0.0
    %1080 = vmatpush.msra.mxu0 %v227
    %1081 = vmatpush.msra.mxu0 %v225
    %1082 = vmatpush.msra.mxu0 %v223
    %1083 = vmatpush.msra.mxu0 %v221
    %1084 = vmatpush.msra.mxu0 %v219
    %1085 = vmatpush.msra.mxu0 %v217
    %1086 = vmatpush.msra.mxu0 %v215
    %1087 = vmatpush.msra.mxu0 %v213
    %1088 = vmatmul.f32.gmra.mxu0 %v1070
    %v1089 = vpop.f32.mrf.mxu0
    %v1090 = vadd.f32 0.0, %v1089
    %1091 = vdwg.mxu0
    %1092 = vmatpush.msra.mxu0 0.0
    %1093 = vmatpush.msra.mxu0 0.0
    %1094 = vmatpush.msra.mxu0 0.0
    %1095 = vmatpush.msra.mxu0 0.0
    %1096 = vmatpush.msra.mxu0 0.0
    %1097 = vmatpush.msra.mxu0 0.0
    %1098 = vmatpush.msra.mxu0 0.0
    %1099 = vmatpush.msra.mxu0 0.0
    %1100 = vmatpush.msra.mxu0 %v228
    %1101 = vmatpush.msra.mxu0 %v226
    %1102 = vmatpush.msra.mxu0 %v224
    %1103 = vmatpush.msra.mxu0 %v222
    %1104 = vmatpush.msra.mxu0 %v220
    %1105 = vmatpush.msra.mxu0 %v218
    %1106 = vmatpush.msra.mxu0 %v216
    %1107 = vmatpush.msra.mxu0 %v214
    %1108 = vmatmul.f32.gmra.mxu0 %v1070
    %v1109 = vpop.f32.mrf.mxu0
    %v1110 = vadd.f32 0.0, %v1109
    %1111 = vdwg.mxu0
    %v1112 = vadd.f32 %v311, %v1090
    %v1113 = vadd.f32 %v312, %v1110
    %v1114 = vxor.u32 %v1112, 2147483648
    %v1115 = vxor.u32 %v1113, 2147483648
    %v1116 = vmul.f32 %v1114, 1.442695
    %v1117 = vpow.pop %v1116
    %v1118 = vmul.f32 %v1115, 1.442695
    %v1119 = vpow.pop %v1118
    %v1120 = vadd.f32 %v1117, 1.0
    %v1121 = vadd.f32 %v1119, 1.0
    %v1122 = vrcp.pop %v1120
    %v1123 = vmul.f32 %v1120, %v1122
    %v1124 = vsub.f32 1.0, %v1123
    %v1125 = vmul.f32 %v1122, %v1124
    %v1126 = vadd.f32 %v1122, %v1125
    %vm1127 = vweird.f32 %v1120
    %vm1128 = vweird.f32 %v1122
    %vm1129 = vmor %vm1127, %vm1128
    %v1130 = vsel %vm1129, %v1122, %v1126
    %v1131 = vand.u32 2147483647, %v1120
    %vm1132 = vcmp.eq.f32.partialorder %v1131, 8.507059e+37
    %v1133 = vand.u32 %v1120, 2147483648
    %v1134 = vor.u32 1.1754944e-38, %v1133
    %v1135 = vsel %vm1132, %v1134, %v1130
    %v1136 = vmul.f32 1.0, %v1135
    %v1137 = vrcp.pop %v1121
    %v1138 = vmul.f32 %v1121, %v1137
    %v1139 = vsub.f32 1.0, %v1138
    %v1140 = vmul.f32 %v1137, %v1139
    %v1141 = vadd.f32 %v1137, %v1140
    %vm1142 = vweird.f32 %v1121
    %vm1143 = vweird.f32 %v1137
    %vm1144 = vmor %vm1142, %vm1143
    %v1145 = vsel %vm1144, %v1137, %v1141
    %v1146 = vand.u32 2147483647, %v1121
    %vm1147 = vcmp.eq.f32.partialorder %v1146, 8.507059e+37
    %v1148 = vand.u32 %v1121, 2147483648
    %v1149 = vor.u32 1.1754944e-38, %v1148
    %v1150 = vsel %vm1147, %v1149, %v1145
    %v1151 = vmul.f32 1.0, %v1150
    %v1152 = vmul.f32 %v1151, 2.0
    %v1153 = vsub.f32 %v1152, 1.0
    %1155 = vrot.lane.b32.xlu0 %v1063, 64
    %v1156 = vpop.permute.xlu0 %1155
    %v1158 = vmul.f32 %v1136, %v1156
    %v1159 = vmul.f32 %v1136, %v1153
    %1161 = vrot.lane.b32.xlu0 %v1159, 64
    %v1162 = vpop.permute.xlu0 %1161
    %v1164 = vadd.f32 %v1158, %v1162
    %v1165 = vtanh.pop %v1164
    %v1166 = vmul.f32 %v1151, %v1165
    %1168 = vrot.lane.b32.xlu0 %v1166, 64
    %v1169 = vpop.permute.xlu0 %1168
    %v1171 = vsel %vm315, %v1169, %v1068
    %v1172 = vld [vmem:[#allocation2 + $0x180] sm:$0xff]
    %v1173 = vld [vmem:[#allocation2 + $0x190] sm:$0xff]
    %v1174 = vld [vmem:[#allocation2 + $0x1a0] sm:$0xff]
    %v1175 = vld [vmem:[#allocation2 + $0x1b0] sm:$0xff]
    %v1176 = vld [vmem:[#allocation2 + $0x1c0] sm:$0xff]
    %v1177 = vld [vmem:[#allocation2 + $0x1d0] sm:$0xff]
    %v1178 = vld [vmem:[#allocation2 + $0x1e0] sm:$0xff]
    %v1179 = vld [vmem:[#allocation2 + $0x1f0] sm:$0xff]
    %v1180 = vld [vmem:[#allocation2 + $0x188] sm:$0xff]
    %v1181 = vld [vmem:[#allocation2 + $0x198] sm:$0xff]
    %v1182 = vld [vmem:[#allocation2 + $0x1a8] sm:$0xff]
    %v1183 = vld [vmem:[#allocation2 + $0x1b8] sm:$0xff]
    %v1184 = vld [vmem:[#allocation2 + $0x1c8] sm:$0xff]
    %v1185 = vld [vmem:[#allocation2 + $0x1d8] sm:$0xff]
    %v1186 = vld [vmem:[#allocation2 + $0x1e8] sm:$0xff]
    %v1187 = vld [vmem:[#allocation2 + $0x1f8] sm:$0xff]
    %v1188 = vld [vmem:[#allocation2 + $0x200] ss:$0 sm:$0xff]
    %v1189 = vld [vmem:[#allocation2 + $0x208] ss:$0 sm:$0xff]
    %v1191 = vsel %vm316, %v1171, 0
    %1193 = vmatpush.msra.mxu0 0.0
    %1194 = vmatpush.msra.mxu0 0.0
    %1195 = vmatpush.msra.mxu0 0.0
    %1196 = vmatpush.msra.mxu0 0.0
    %1197 = vmatpush.msra.mxu0 0.0
    %1198 = vmatpush.msra.mxu0 0.0
    %1199 = vmatpush.msra.mxu0 0.0
    %1200 = vmatpush.msra.mxu0 0.0
    %1201 = vmatpush.msra.mxu0 %v1179
    %1202 = vmatpush.msra.mxu0 %v1178
    %1203 = vmatpush.msra.mxu0 %v1177
    %1204 = vmatpush.msra.mxu0 %v1176
    %1205 = vmatpush.msra.mxu0 %v1175
    %1206 = vmatpush.msra.mxu0 %v1174
    %1207 = vmatpush.msra.mxu0 %v1173
    %1208 = vmatpush.msra.mxu0 %v1172
    %1209 = vmatmul.f32.gmra.mxu0 %v1191
    %v1210 = vpop.f32.mrf.mxu0
    %v1211 = vadd.f32 %v1188, %v1210
    %1212 = vdwg.mxu0
    %v1213 = vmax.f32 %v1211, 0.0
    %v1215 = vsel %vm316, %v1213, 0
    %1217 = vmatpush.msra.mxu0 0.0
    %1218 = vmatpush.msra.mxu0 0.0
    %1219 = vmatpush.msra.mxu0 0.0
    %1220 = vmatpush.msra.mxu0 0.0
    %1221 = vmatpush.msra.mxu0 0.0
    %1222 = vmatpush.msra.mxu0 0.0
    %1223 = vmatpush.msra.mxu0 0.0
    %1224 = vmatpush.msra.mxu0 0.0
    %1225 = vmatpush.msra.mxu0 %v1187
    %1226 = vmatpush.msra.mxu0 %v1186
    %1227 = vmatpush.msra.mxu0 %v1185
    %1228 = vmatpush.msra.mxu0 %v1184
    %1229 = vmatpush.msra.mxu0 %v1183
    %1230 = vmatpush.msra.mxu0 %v1182
    %1231 = vmatpush.msra.mxu0 %v1181
    %1232 = vmatpush.msra.mxu0 %v1180
    %1233 = vmatmul.f32.gmra.mxu0 %v1215
    %v1234 = vpop.f32.mrf.mxu0
    %v1235 = vadd.f32 %v1189, %v1234
    %1236 = vdwg.mxu0
    %vm1237 = vcmask 130048
    %1238 = vst.msk [vmem:[#allocation5] sm:$0xff] %vm1237, %v1235
    // Predicated region
    $region14: #{tpu_custom_call.1} parent=1 // pred_check
      _
    $region15: #{tpu_custom_call.1} parent=1 // pred_check_branch
      %1240 = sbr.rel (0) target = $region17
    $region16: #{tpu_custom_call.1} parent=1 // pred_region
      %1242 = vsyncadd [#allocation4], 0
      %s1244 = sshll.u32 [#allocation5], 4
      %s1245 = int_to_ptr.vmem [resolvable:$true] %s1244
      %s1246 = sshll.u32 %s2, 4
      %s1247 = int_to_ptr.hbm [resolvable:$true] %s1246
      %1249 = dma.vmem_to_hbm [thread:$0]  %s1245, 128, %s1247, [#allocation4]
    $region17: #{tpu_custom_call.1} parent=1 // pred_fallthru
      _
    // Predicated region
    $region18: #{tpu_custom_call.1} parent=1 // pred_check
      _
    $region19: #{tpu_custom_call.1} parent=1 // pred_check_branch
      %1251 = sbr.rel (0) target = $region21
    $region20: #{tpu_custom_call.1} parent=1 // pred_region
      %1253 = dma.done [#allocation4], 128
    $region21: #{tpu_custom_call.1} parent=1 // pred_fallthru
      _
    %1254 = vsyncpa [#allocation3], 1
    %1255 = vsyncpa [#allocation4], 1

</llo_original>
